<compile_context>
chip_gen: v7x
topology: tpu7x:2x2x1
jax: 0.10.0
libtpu: 0.0.40
codegen_flags: <defaults>
</compile_context>

<pallas_src>
import jax
import jax.numpy as jnp
from jax import lax
from jax.experimental import pallas as pl
from jax.experimental.pallas import tpu as pltpu

C_IN = 384
C_OUT = 384
KH = 3        # kernel_size = (3, 1)
PAD_H = 1     # padding     = (1, 0)
EPS = 1e-3

VMEM_LIMIT = 32 * 1024 * 1024   # explicit scoped-VMEM budget (safe on v5e/v6e/v7x)


def _conv_stats_kernel(H, W):
    """Pass 1: (3,1) conv via three shifted MXU dots + per-channel sum/sumsq."""
    HW = H * W

    def kernel(x_ref, w_ref, conv_ref, sum_ref, ssq_ref):
        # x_ref:    ((H+2)*W, C_IN) f32  H-padded rows of one image (row-major (h, w))
        # w_ref:    (KH, C_IN, C_OUT)    bf16, VMEM-resident across the grid
        # conv_ref: (HW, C_OUT)          f32 conv output block for this image
        # sum_ref / ssq_ref: (1, C_OUT)  f32 accumulators, resident across the n axis
        x0 = x_ref[pl.ds(0 * W, HW), :].astype(jnp.bfloat16)
        x1 = x_ref[pl.ds(1 * W, HW), :].astype(jnp.bfloat16)
        x2 = x_ref[pl.ds(2 * W, HW), :].astype(jnp.bfloat16)

        conv = jnp.dot(x0, w_ref[0], preferred_element_type=jnp.float32)
        conv = conv + jnp.dot(x1, w_ref[1], preferred_element_type=jnp.float32)
        conv = conv + jnp.dot(x2, w_ref[2], preferred_element_type=jnp.float32)
        conv_ref[...] = conv

        @pl.when(pl.program_id(0) == 0)
        def _init():
            sum_ref[...] = jnp.zeros_like(sum_ref)
            ssq_ref[...] = jnp.zeros_like(ssq_ref)

        sum_ref[...] += jnp.sum(conv, axis=0, keepdims=True)
        ssq_ref[...] += jnp.sum(conv * conv, axis=0, keepdims=True)

    return kernel


def _bn_relu_kernel(conv_ref, scale_ref, bias_ref, o_ref):
    """Pass 2: folded BN (scale/bias) + ReLU, lane-dense stores."""
    y = conv_ref[...] * scale_ref[...] + bias_ref[...]
    o_ref[...] = jnp.maximum(y, 0.0)


@jax.jit
def conv_bn_relu(x_nchw, w_pt, gamma, beta):
    """x_nchw: (N, 384, H, W) f32; w_pt: (384, 384, 3, 1) OIHW. Returns NCHW f32."""
    N, C, H, W = x_nchw.shape
    assert C == C_IN
    Hp = H + 2 * PAD_H
    HW = H * W

    # NCHW -> NHWC (channels on lanes), zero-pad H, flatten (h, w) rows.
    # Under jit this transpose+pad+reshape fuses into one HBM pass (the transpose is
    # required anyway since the module's I/O is NCHW).
    x_nhwc = jnp.transpose(x_nchw, (0, 2, 3, 1)).astype(jnp.float32)
    x_pad = jnp.pad(x_nhwc, ((0, 0), (PAD_H, PAD_H), (0, 0), (0, 0)))
    x_rows = x_pad.reshape(N, Hp * W, C_IN)

    # (C_out, C_in, 3, 1) -> (3, C_in, C_out), bf16 (~0.85 MiB, stays VMEM-resident).
    w = jnp.transpose(w_pt[..., 0], (2, 1, 0)).astype(jnp.bfloat16)

    conv, csum, cssq = pl.pallas_call(
        _conv_stats_kernel(H, W),
        grid=(N,),
        in_specs=[
            pl.BlockSpec((None, Hp * W, C_IN), lambda n: (n, 0, 0)),
            pl.BlockSpec((KH, C_IN, C_OUT), lambda n: (0, 0, 0)),   # resident weights
        ],
        out_specs=(
            pl.BlockSpec((None, HW, C_OUT), lambda n: (n, 0, 0)),
            pl.BlockSpec((1, C_OUT), lambda n: (0, 0)),             # resident accumulator
            pl.BlockSpec((1, C_OUT), lambda n: (0, 0)),             # resident accumulator
        ),
        out_shape=(
            jax.ShapeDtypeStruct((N, HW, C_OUT), jnp.float32),
            jax.ShapeDtypeStruct((1, C_OUT), jnp.float32),
            jax.ShapeDtypeStruct((1, C_OUT), jnp.float32),
        ),
        compiler_params=pltpu.CompilerParams(
            dimension_semantics=("arbitrary",),    # stats accumulate across n
            vmem_limit_bytes=VMEM_LIMIT,
        ),
    )(x_rows, w)

    # Fold training-mode BatchNorm (batch mean, biased variance) into scale/bias (f32).
    count = jnp.float32(N * HW)
    mean = csum / count
    var = jnp.maximum(cssq / count - mean * mean, 0.0)
    scale = gamma.reshape(1, C_OUT).astype(jnp.float32) * lax.rsqrt(var + EPS)
    bias = beta.reshape(1, C_OUT).astype(jnp.float32) - mean * scale

    out_rows = pl.pallas_call(
        _bn_relu_kernel,
        grid=(N,),
        in_specs=[
            pl.BlockSpec((None, HW, C_OUT), lambda n: (n, 0, 0)),
            pl.BlockSpec((1, C_OUT), lambda n: (0, 0)),
            pl.BlockSpec((1, C_OUT), lambda n: (0, 0)),
        ],
        out_specs=pl.BlockSpec((None, HW, C_OUT), lambda n: (n, 0, 0)),
        out_shape=jax.ShapeDtypeStruct((N, HW, C_OUT), jnp.float32),
        compiler_params=pltpu.CompilerParams(
            dimension_semantics=("parallel",),     # independent per image (2 TCs on v7x)
            vmem_limit_bytes=VMEM_LIMIT,
        ),
    )(conv, scale, bias)

    out_nhwc = out_rows.reshape(N, H, W, C_OUT)
    return jnp.transpose(out_nhwc, (0, 3, 1, 2))   # back to NCHW


def reference(x_nchw, w_pt, gamma, beta):
    """Plain-JAX f32 reference of the PyTorch forward (training-mode BN)."""
    y = lax.conv_general_dilated(
        x_nchw.astype(jnp.float32),
        w_pt.astype(jnp.float32),
        window_strides=(1, 1),
        padding=((PAD_H, PAD_H), (0, 0)),
        dimension_numbers=("NCHW", "OIHW", "NCHW"),
        precision=lax.Precision.HIGHEST,
    )
    mean = jnp.mean(y, axis=(0, 2, 3), keepdims=True)
    var = jnp.mean((y - mean) ** 2, axis=(0, 2, 3), keepdims=True)
    yn = (y - mean) * lax.rsqrt(var + EPS)
    yn = yn * gamma.reshape(1, -1, 1, 1) + beta.reshape(1, -1, 1, 1)
    return jnp.maximum(yn, 0.0)


if __name__ == "__main__":
    key = jax.random.PRNGKey(0)
    k1, k2, k3, k4 = jax.random.split(key, 4)

    # Module's own input shape: (1, 384, 5, 5).
    N, H, W = 1, 5, 5
    x = jax.random.normal(k1, (N, C_IN, H, W), jnp.float32)
    w_pt = 0.05 * jax.random.normal(k2, (C_OUT, C_IN, KH, 1), jnp.float32)
    gamma = 1.0 + 0.1 * jax.random.normal(k3, (C_OUT,), jnp.float32)
    beta = 0.1 * jax.random.normal(k4, (C_OUT,), jnp.float32)

    out = jax.block_until_ready(conv_bn_relu(x, w_pt, gamma, beta))
    assert out.shape == (N, C_OUT, H, W)

    # Tight check: reference fed the same bf16-quantized conv inputs (isolates conv
    # structure / BN / ReLU correctness from the intended bf16-MXU rounding).
    xq = x.astype(jnp.bfloat16).astype(jnp.float32)
    wq = w_pt.astype(jnp.bfloat16).astype(jnp.float32)
    ref_q = jax.block_until_ready(reference(xq, wq, gamma, beta))
    err_q = float(jnp.max(jnp.abs(out - ref_q)))
    assert err_q < 2e-3, f"mismatch vs bf16-input reference: max abs err = {err_q}"

    # Loose check: full-f32 PyTorch-semantics reference (difference = bf16 MXU rounding).
    ref = jax.block_until_ready(reference(x, w_pt, gamma, beta))
    err = float(jnp.max(jnp.abs(out - ref)))
    assert err < 6e-2, f"mismatch vs f32 reference: max abs err = {err}"

    # Exercise the n-grid + cross-batch statistics accumulation path.
    x2 = jax.random.normal(jax.random.PRNGKey(1), (2, C_IN, H, W), jnp.float32)
    out2 = jax.block_until_ready(conv_bn_relu(x2, w_pt, gamma, beta))
    ref2 = jax.block_until_ready(
        reference(x2.astype(jnp.bfloat16).astype(jnp.float32), wq, gamma, beta))
    err2 = float(jnp.max(jnp.abs(out2 - ref2)))
    assert err2 < 2e-3, f"mismatch (N=2) vs bf16-input reference: max abs err = {err2}"

    print("KERNEL_OK")
</pallas_src>

<mosaic_0001>
module attributes {stable_mosaic.version = 11 : i64} {
  func.func @kernel(%arg0: i32, %arg1: memref<1x35x384xf32, #tpu.memory_space<vmem>>, %arg2: memref<3x384x384xbf16, #tpu.memory_space<vmem>>, %arg3: memref<1x25x384xf32, #tpu.memory_space<vmem>>, %arg4: memref<1x384xf32, #tpu.memory_space<vmem>>, %arg5: memref<1x384xf32, #tpu.memory_space<vmem>>) attributes {dimension_semantics = [#tpu.dimension_semantics<arbitrary>], iteration_bounds = array<i64: 1>, scalar_prefetch = 0 : i64, scratch_operands = 0 : i64, tpu.core_type = #tpu.core_type<tc>, window_params = [{transform_indices = @transform_0, window_bounds = array<i64: 1, 35, 384>}, {pipeline_mode = #tpu.pipeline_mode<synchronous>, transform_indices = @transform_1, window_bounds = array<i64: 3, 384, 384>}, {transform_indices = @transform_2, window_bounds = array<i64: 1, 25, 384>}, {pipeline_mode = #tpu.pipeline_mode<synchronous>, transform_indices = @transform_3, window_bounds = array<i64: 1, 384>}, {pipeline_mode = #tpu.pipeline_mode<synchronous>, transform_indices = @transform_4, window_bounds = array<i64: 1, 384>}]} {
    %c0 = arith.constant 0 : index
    %c0_0 = arith.constant 0 : index
    %c0_1 = arith.constant 0 : index
    %0 = vector.load %arg1[%c0, %c0_0, %c0_1] : memref<1x35x384xf32, #tpu.memory_space<vmem>>, vector<1x25x384xf32>
    %1 = vector.shape_cast %0 : vector<1x25x384xf32> to vector<25x384xf32>
    %2 = arith.truncf %1 : vector<25x384xf32> to vector<25x384xbf16>
    %c0_2 = arith.constant 0 : index
    %c5 = arith.constant 5 : index
    %c0_3 = arith.constant 0 : index
    %3 = vector.load %arg1[%c0_2, %c5, %c0_3] : memref<1x35x384xf32, #tpu.memory_space<vmem>>, vector<1x25x384xf32>
    %4 = vector.shape_cast %3 : vector<1x25x384xf32> to vector<25x384xf32>
    %5 = arith.truncf %4 : vector<25x384xf32> to vector<25x384xbf16>
    %c0_4 = arith.constant 0 : index
    %c10 = arith.constant 10 : index
    %c0_5 = arith.constant 0 : index
    %6 = vector.load %arg1[%c0_4, %c10, %c0_5] : memref<1x35x384xf32, #tpu.memory_space<vmem>>, vector<1x25x384xf32>
    %7 = vector.shape_cast %6 : vector<1x25x384xf32> to vector<25x384xf32>
    %8 = arith.truncf %7 : vector<25x384xf32> to vector<25x384xbf16>
    %c0_6 = arith.constant 0 : index
    %c0_7 = arith.constant 0 : index
    %c0_8 = arith.constant 0 : index
    %9 = vector.load %arg2[%c0_6, %c0_7, %c0_8] : memref<3x384x384xbf16, #tpu.memory_space<vmem>>, vector<1x384x384xbf16>
    %10 = vector.shape_cast %9 : vector<1x384x384xbf16> to vector<384x384xbf16>
    %cst = arith.constant dense<0.000000e+00> : vector<25x384xf32>
    %11 = tpu.matmul %2, %10, %cst {dimension_numbers = #tpu.dot_dimension_numbers<[1], [0], [0], [1], [0, 0, 1, 1], [], []>} : vector<25x384xbf16>, vector<384x384xbf16>, vector<25x384xf32> -> vector<25x384xf32>
    %c1 = arith.constant 1 : index
    %c0_9 = arith.constant 0 : index
    %c0_10 = arith.constant 0 : index
    %12 = vector.load %arg2[%c1, %c0_9, %c0_10] : memref<3x384x384xbf16, #tpu.memory_space<vmem>>, vector<1x384x384xbf16>
    %13 = vector.shape_cast %12 : vector<1x384x384xbf16> to vector<384x384xbf16>
    %cst_11 = arith.constant dense<0.000000e+00> : vector<25x384xf32>
    %14 = tpu.matmul %5, %13, %cst_11 {dimension_numbers = #tpu.dot_dimension_numbers<[1], [0], [0], [1], [0, 0, 1, 1], [], []>} : vector<25x384xbf16>, vector<384x384xbf16>, vector<25x384xf32> -> vector<25x384xf32>
    %15 = arith.addf %11, %14 : vector<25x384xf32>
    %c2 = arith.constant 2 : index
    %c0_12 = arith.constant 0 : index
    %c0_13 = arith.constant 0 : index
    %16 = vector.load %arg2[%c2, %c0_12, %c0_13] : memref<3x384x384xbf16, #tpu.memory_space<vmem>>, vector<1x384x384xbf16>
    %17 = vector.shape_cast %16 : vector<1x384x384xbf16> to vector<384x384xbf16>
    %cst_14 = arith.constant dense<0.000000e+00> : vector<25x384xf32>
    %18 = tpu.matmul %8, %17, %cst_14 {dimension_numbers = #tpu.dot_dimension_numbers<[1], [0], [0], [1], [0, 0, 1, 1], [], []>} : vector<25x384xbf16>, vector<384x384xbf16>, vector<25x384xf32> -> vector<25x384xf32>
    %19 = arith.addf %15, %18 : vector<25x384xf32>
    %c0_15 = arith.constant 0 : index
    %c0_16 = arith.constant 0 : index
    %c0_17 = arith.constant 0 : index
    %20 = vector.load %arg3[%c0_15, %c0_16, %c0_17] : memref<1x25x384xf32, #tpu.memory_space<vmem>>, vector<1x25x384xf32>
    %21 = vector.shape_cast %20 : vector<1x25x384xf32> to vector<25x384xf32>
    %22 = vector.shape_cast %19 : vector<25x384xf32> to vector<1x25x384xf32>
    tpu.vector_store %arg3[%c0_15, %c0_16, %c0_17], %22 {strides = array<i32>} : memref<1x25x384xf32, #tpu.memory_space<vmem>>, vector<1x25x384xf32>,
    %c0_i32 = arith.constant 0 : i32
    %23 = arith.cmpi eq, %arg0, %c0_i32 : i32
    %24 = arith.extui %23 : i1 to i32
    %c0_i32_18 = arith.constant 0 : i32
    %25 = arith.cmpi ne, %24, %c0_i32_18 : i32
    scf.if %25 {
      %cst_29 = arith.constant 0.000000e+00 : f32
      %37 = vector.broadcast %cst_29 : f32 to vector<1x384xf32>
      %c0_30 = arith.constant 0 : index
      %c0_31 = arith.constant 0 : index
      %38 = vector.load %arg4[%c0_30, %c0_31] : memref<1x384xf32, #tpu.memory_space<vmem>>, vector<1x384xf32>
      tpu.vector_store %arg4[%c0_30, %c0_31], %37 {strides = array<i32>} : memref<1x384xf32, #tpu.memory_space<vmem>>, vector<1x384xf32>,
      %cst_32 = arith.constant 0.000000e+00 : f32
      %39 = vector.broadcast %cst_32 : f32 to vector<1x384xf32>
      %c0_33 = arith.constant 0 : index
      %c0_34 = arith.constant 0 : index
      %40 = vector.load %arg5[%c0_33, %c0_34] : memref<1x384xf32, #tpu.memory_space<vmem>>, vector<1x384xf32>
      tpu.vector_store %arg5[%c0_33, %c0_34], %39 {strides = array<i32>} : memref<1x384xf32, #tpu.memory_space<vmem>>, vector<1x384xf32>,
    } else {
    }
    %c0_19 = arith.constant 0 : index
    %c0_20 = arith.constant 0 : index
    %26 = vector.load %arg4[%c0_19, %c0_20] : memref<1x384xf32, #tpu.memory_space<vmem>>, vector<1x384xf32>
    %cst_21 = arith.constant dense<0.000000e+00> : vector<384xf32>
    %27 = vector.multi_reduction <add>, %19, %cst_21 [0] : vector<25x384xf32> to vector<384xf32>
    %28 = vector.shape_cast %27 : vector<384xf32> to vector<1x384xf32>
    %29 = arith.addf %26, %28 : vector<1x384xf32>
    %c0_22 = arith.constant 0 : index
    %c0_23 = arith.constant 0 : index
    %30 = vector.load %arg4[%c0_22, %c0_23] : memref<1x384xf32, #tpu.memory_space<vmem>>, vector<1x384xf32>
    tpu.vector_store %arg4[%c0_22, %c0_23], %29 {strides = array<i32>} : memref<1x384xf32, #tpu.memory_space<vmem>>, vector<1x384xf32>,
    %c0_24 = arith.constant 0 : index
    %c0_25 = arith.constant 0 : index
    %31 = vector.load %arg5[%c0_24, %c0_25] : memref<1x384xf32, #tpu.memory_space<vmem>>, vector<1x384xf32>
    %32 = arith.mulf %19, %19 : vector<25x384xf32>
    %cst_26 = arith.constant dense<0.000000e+00> : vector<384xf32>
    %33 = vector.multi_reduction <add>, %32, %cst_26 [0] : vector<25x384xf32> to vector<384xf32>
    %34 = vector.shape_cast %33 : vector<384xf32> to vector<1x384xf32>
    %35 = arith.addf %31, %34 : vector<1x384xf32>
    %c0_27 = arith.constant 0 : index
    %c0_28 = arith.constant 0 : index
    %36 = vector.load %arg5[%c0_27, %c0_28] : memref<1x384xf32, #tpu.memory_space<vmem>>, vector<1x384xf32>
    tpu.vector_store %arg5[%c0_27, %c0_28], %35 {strides = array<i32>} : memref<1x384xf32, #tpu.memory_space<vmem>>, vector<1x384xf32>,
    return
  }
  func.func @transform_0(%arg0: i32) -> (i32, i32, i32) {
    %c0_i32 = arith.constant 0 : i32
    %c0_i32_0 = arith.constant 0 : i32
    %c0_i32_1 = arith.constant 0 : i32
    return %arg0, %c0_i32, %c0_i32_0 : i32, i32, i32
  }
  func.func @transform_1(%arg0: i32) -> (i32, i32, i32) {
    %c0_i32 = arith.constant 0 : i32
    %c0_i32_0 = arith.constant 0 : i32
    %c0_i32_1 = arith.constant 0 : i32
    %c0_i32_2 = arith.constant 0 : i32
    return %c0_i32, %c0_i32_0, %c0_i32_1 : i32, i32, i32
  }
  func.func @transform_2(%arg0: i32) -> (i32, i32, i32) {
    %c0_i32 = arith.constant 0 : i32
    %c0_i32_0 = arith.constant 0 : i32
    %c0_i32_1 = arith.constant 0 : i32
    return %arg0, %c0_i32, %c0_i32_0 : i32, i32, i32
  }
  func.func @transform_3(%arg0: i32) -> (i32, i32) {
    %c0_i32 = arith.constant 0 : i32
    %c0_i32_0 = arith.constant 0 : i32
    %c0_i32_1 = arith.constant 0 : i32
    return %c0_i32, %c0_i32_0 : i32, i32
  }
  func.func @transform_4(%arg0: i32) -> (i32, i32) {
    %c0_i32 = arith.constant 0 : i32
    %c0_i32_0 = arith.constant 0 : i32
    %c0_i32_1 = arith.constant 0 : i32
    return %c0_i32, %c0_i32_0 : i32, i32
  }
}

module attributes {stable_mosaic.version = 11 : i64} {
  func.func @_bn_relu_kernel(%arg0: i32, %arg1: memref<1x25x384xf32, #tpu.memory_space<vmem>>, %arg2: memref<1x384xf32, #tpu.memory_space<vmem>>, %arg3: memref<1x384xf32, #tpu.memory_space<vmem>>, %arg4: memref<1x25x384xf32, #tpu.memory_space<vmem>>) attributes {dimension_semantics = [#tpu.dimension_semantics<parallel>], iteration_bounds = array<i64: 1>, scalar_prefetch = 0 : i64, scratch_operands = 0 : i64, tpu.core_type = #tpu.core_type<tc>, window_params = [{transform_indices = @transform_0, window_bounds = array<i64: 1, 25, 384>}, {pipeline_mode = #tpu.pipeline_mode<synchronous>, transform_indices = @transform_1, window_bounds = array<i64: 1, 384>}, {pipeline_mode = #tpu.pipeline_mode<synchronous>, transform_indices = @transform_2, window_bounds = array<i64: 1, 384>}, {transform_indices = @transform_3, window_bounds = array<i64: 1, 25, 384>}]} {
    %c0 = arith.constant 0 : index
    %c0_0 = arith.constant 0 : index
    %c0_1 = arith.constant 0 : index
    %0 = vector.load %arg1[%c0, %c0_0, %c0_1] : memref<1x25x384xf32, #tpu.memory_space<vmem>>, vector<1x25x384xf32>
    %1 = vector.shape_cast %0 : vector<1x25x384xf32> to vector<25x384xf32>
    %c0_2 = arith.constant 0 : index
    %c0_3 = arith.constant 0 : index
    %2 = vector.load %arg2[%c0_2, %c0_3] : memref<1x384xf32, #tpu.memory_space<vmem>>, vector<1x384xf32>
    %3 = vector.broadcast %2 : vector<1x384xf32> to vector<25x384xf32>
    %4 = arith.mulf %1, %3 : vector<25x384xf32>
    %c0_4 = arith.constant 0 : index
    %c0_5 = arith.constant 0 : index
    %5 = vector.load %arg3[%c0_4, %c0_5] : memref<1x384xf32, #tpu.memory_space<vmem>>, vector<1x384xf32>
    %6 = vector.broadcast %5 : vector<1x384xf32> to vector<25x384xf32>
    %7 = arith.addf %4, %6 : vector<25x384xf32>
    %cst = arith.constant 0.000000e+00 : f32
    %8 = vector.broadcast %cst : f32 to vector<25x384xf32>
    %9 = arith.maximumf %7, %8 : vector<25x384xf32>
    %c0_6 = arith.constant 0 : index
    %c0_7 = arith.constant 0 : index
    %c0_8 = arith.constant 0 : index
    %10 = vector.load %arg4[%c0_6, %c0_7, %c0_8] : memref<1x25x384xf32, #tpu.memory_space<vmem>>, vector<1x25x384xf32>
    %11 = vector.shape_cast %10 : vector<1x25x384xf32> to vector<25x384xf32>
    %12 = vector.shape_cast %9 : vector<25x384xf32> to vector<1x25x384xf32>
    tpu.vector_store %arg4[%c0_6, %c0_7, %c0_8], %12 {strides = array<i32>} : memref<1x25x384xf32, #tpu.memory_space<vmem>>, vector<1x25x384xf32>,
    return
  }
  func.func @transform_0(%arg0: i32) -> (i32, i32, i32) {
    %c0_i32 = arith.constant 0 : i32
    %c0_i32_0 = arith.constant 0 : i32
    %c0_i32_1 = arith.constant 0 : i32
    return %arg0, %c0_i32, %c0_i32_0 : i32, i32, i32
  }
  func.func @transform_1(%arg0: i32) -> (i32, i32) {
    %c0_i32 = arith.constant 0 : i32
    %c0_i32_0 = arith.constant 0 : i32
    %c0_i32_1 = arith.constant 0 : i32
    return %c0_i32, %c0_i32_0 : i32, i32
  }
  func.func @transform_2(%arg0: i32) -> (i32, i32) {
    %c0_i32 = arith.constant 0 : i32
    %c0_i32_0 = arith.constant 0 : i32
    %c0_i32_1 = arith.constant 0 : i32
    return %c0_i32, %c0_i32_0 : i32, i32
  }
  func.func @transform_3(%arg0: i32) -> (i32, i32, i32) {
    %c0_i32 = arith.constant 0 : i32
    %c0_i32_0 = arith.constant 0 : i32
    %c0_i32_1 = arith.constant 0 : i32
    return %arg0, %c0_i32, %c0_i32_0 : i32, i32, i32
  }
}

</mosaic_0001>

<llo_original>
// kernel: conv_bn_relu.3
$region0: #{conv_bn_relu.3}
  #allocation0 [shape = 'u32[]', space=smem, size = 0x4, offset = 0x4, fixed_abs, tag = 'smem constant byte address 0x4 - core index']
  #allocation1 [shape = 'u32[144,128]{1,0:T(1,128)}', space=vmem, size = 0x12000, scoped, tag = 'internal scratch']
  %s0 = inlined_call_operand.vmem [shape: f32[1,25,384], index: 0, kind: input, shape index: {}]
  %s1 = inlined_call_operand.vmem [shape: f32[1,384], index: 1, kind: input, shape index: {}]
  %s2 = inlined_call_operand.vmem [shape: f32[1,384], index: 2, kind: input, shape index: {}]
  %s3 = inlined_call_operand.vmem [shape: f32[1,25,384], index: 3, kind: output, shape index: {}]
  %s4 = sld [smem:[#allocation0]]
  $region22: #{conv_bn_relu.3} parent=0
    _
  %s6 = ssub.s32 1, %s4
  %s7 = scalar_select 0, %s6, %s4
  // Predicated region
  $region2: #{conv_bn_relu.3} parent=0 // pred_check
    _
  $region3: #{conv_bn_relu.3} parent=0 // pred_check_branch
    %9 = sbr.rel (0) target = $region5
  $region4: #{conv_bn_relu.3} parent=0 // pred_region
    _
  $region5: #{conv_bn_relu.3} parent=0 // pred_fallthru
    _
  // Predicated region
  $region6: #{conv_bn_relu.3} parent=0 // pred_check
    _
  $region7: #{conv_bn_relu.3} parent=0 // pred_check_branch
    %11 = sbr.rel (0) target = $region9
  $region8: #{conv_bn_relu.3} parent=0 // pred_region
    _
  $region9: #{conv_bn_relu.3} parent=0 // pred_fallthru
    _
  // Predicated region
  $region10: #{conv_bn_relu.3} parent=0 // pred_check
    _
  $region11: #{conv_bn_relu.3} parent=0 // pred_check_branch
    %13 = sbr.rel (0) target = $region13
  $region12: #{conv_bn_relu.3} parent=0 // pred_region
    _
  $region13: #{conv_bn_relu.3} parent=0 // pred_fallthru
    _
  %v14 = vld [vmem:[%s0] sm:$0xff]
  %v15 = vld [vmem:[%s0 + $0x8] sm:$0xff]
  %v16 = vld [vmem:[%s0 + $0x10] sm:$0xff]
  %v17 = vld [vmem:[%s0 + $0x18] sm:$0xff]
  %v18 = vld [vmem:[%s0 + $0x20] sm:$0xff]
  %v19 = vld [vmem:[%s0 + $0x28] sm:$0xff]
  %v20 = vld [vmem:[%s0 + $0x30] sm:$0xff]
  %v21 = vld [vmem:[%s0 + $0x38] sm:$0xff]
  %v22 = vld [vmem:[%s0 + $0x40] sm:$0xff]
  %v23 = vld [vmem:[%s0 + $0x48] sm:$0x1]
  %v24 = vld [vmem:[%s0 + $0x50] sm:$0x1]
  %v25 = vld [vmem:[%s0 + $0x58] sm:$0x1]
  %v26 = vld [vmem:[%s1] sm:$0x7]
  %v28 = vlaneseq
  %v29 = vshrl.u32 %v28, 7
  %v30 = vsub.s32 0, %v29
  %v31 = vrot.slane %v26, %v30
  %v32 = vlaneseq
  %v33 = vshrl.u32 %v32, 7
  %v34 = vsub.s32 1, %v33
  %v35 = vrot.slane %v26, %v34
  %v36 = vlaneseq
  %v37 = vshrl.u32 %v36, 7
  %v38 = vsub.s32 2, %v37
  %v39 = vrot.slane %v26, %v38
  %v43 = vmul.f32 %v14, %v31
  %v44 = vmul.f32 %v15, %v35
  %v45 = vmul.f32 %v16, %v39
  %v46 = vmul.f32 %v17, %v31
  %v47 = vmul.f32 %v18, %v35
  %v48 = vmul.f32 %v19, %v39
  %v49 = vmul.f32 %v20, %v31
  %v50 = vmul.f32 %v21, %v35
  %v51 = vmul.f32 %v22, %v39
  %v52 = vmul.f32 %v23, %v31
  %v53 = vmul.f32 %v24, %v35
  %v54 = vmul.f32 %v25, %v39
  %v55 = vld [vmem:[%s2] sm:$0x7]
  %v57 = vlaneseq
  %v58 = vshrl.u32 %v57, 7
  %v59 = vsub.s32 0, %v58
  %v60 = vrot.slane %v55, %v59
  %v61 = vlaneseq
  %v62 = vshrl.u32 %v61, 7
  %v63 = vsub.s32 1, %v62
  %v64 = vrot.slane %v55, %v63
  %v65 = vlaneseq
  %v66 = vshrl.u32 %v65, 7
  %v67 = vsub.s32 2, %v66
  %v68 = vrot.slane %v55, %v67
  %v72 = vadd.f32 %v43, %v60
  %v73 = vadd.f32 %v44, %v64
  %v74 = vadd.f32 %v45, %v68
  %v75 = vadd.f32 %v46, %v60
  %v76 = vadd.f32 %v47, %v64
  %v77 = vadd.f32 %v48, %v68
  %v78 = vadd.f32 %v49, %v60
  %v79 = vadd.f32 %v50, %v64
  %v80 = vadd.f32 %v51, %v68
  %v81 = vadd.f32 %v52, %v60
  %v82 = vadd.f32 %v53, %v64
  %v83 = vadd.f32 %v54, %v68
  %v84 = vmax.f32 %v72, 0.0
  %v85 = vmax.f32 %v73, 0.0
  %v86 = vmax.f32 %v74, 0.0
  %v87 = vmax.f32 %v75, 0.0
  %v88 = vmax.f32 %v76, 0.0
  %v89 = vmax.f32 %v77, 0.0
  %v90 = vmax.f32 %v78, 0.0
  %v91 = vmax.f32 %v79, 0.0
  %v92 = vmax.f32 %v80, 0.0
  %v93 = vmax.f32 %v81, 0.0
  %v94 = vmax.f32 %v82, 0.0
  %v95 = vmax.f32 %v83, 0.0
  %96 = vst [vmem:[%s3] sm:$0xff] %v84
  %97 = vst [vmem:[%s3 + $0x8] sm:$0xff] %v85
  %98 = vst [vmem:[%s3 + $0x10] sm:$0xff] %v86
  %99 = vst [vmem:[%s3 + $0x18] sm:$0xff] %v87
  %100 = vst [vmem:[%s3 + $0x20] sm:$0xff] %v88
  %101 = vst [vmem:[%s3 + $0x28] sm:$0xff] %v89
  %102 = vst [vmem:[%s3 + $0x30] sm:$0xff] %v90
  %103 = vst [vmem:[%s3 + $0x38] sm:$0xff] %v91
  %104 = vst [vmem:[%s3 + $0x40] sm:$0xff] %v92
  %105 = vst [vmem:[%s3 + $0x48] sm:$0x1] %v93
  %106 = vst [vmem:[%s3 + $0x50] sm:$0x1] %v94
  %107 = vst [vmem:[%s3 + $0x58] sm:$0x1] %v95
  // Predicated region
  $region14: #{conv_bn_relu.3} parent=0 // pred_check
    _
  $region15: #{conv_bn_relu.3} parent=0 // pred_check_branch
    %109 = sbr.rel (0) target = $region17
  $region16: #{conv_bn_relu.3} parent=0 // pred_region
    _
  $region17: #{conv_bn_relu.3} parent=0 // pred_fallthru
    _
  // Predicated region
  $region18: #{conv_bn_relu.3} parent=0 // pred_check
    _
  $region19: #{conv_bn_relu.3} parent=0 // pred_check_branch
    %111 = sbr.rel (0) target = $region21
  $region20: #{conv_bn_relu.3} parent=0 // pred_region
    _
  $region21: #{conv_bn_relu.3} parent=0 // pred_fallthru
    _

// kernel: conv_bn_relu.2
$region0: #{conv_bn_relu.2}
  #allocation0 [shape = 'u32[]', space=smem, size = 0x4, offset = 0x4, fixed_abs, tag = 'smem constant byte address 0x4 - core index']
  #allocation1 [shape = 'u32[144,128]{1,0:T(1,128)}', space=vmem, size = 0x12000, scoped, tag = 'internal scratch']
  %s0 = inlined_call_operand.vmem [shape: f32[1,35,384], index: 0, kind: input, shape index: {}]
  %s1 = inlined_call_operand.vmem [shape: bf16[3,384,384], index: 1, kind: input, shape index: {}]
  %s2 = inlined_call_operand.vmem [shape: f32[1,25,384], index: 2, kind: output, shape index: {0}]
  %s3 = inlined_call_operand.vmem [shape: f32[1,384], index: 3, kind: output, shape index: {1}]
  %s4 = inlined_call_operand.vmem [shape: f32[1,384], index: 4, kind: output, shape index: {2}]
  %5 = xla_tuple %s2, %s3, %s4
  %s6 = sld [smem:[#allocation0]]
  $region38: #{conv_bn_relu.2} parent=0
    _
  %s8 = ssub.s32 1, %s6
  %s9 = scalar_select 0, %s8, %s6
  // Predicated region
  $region2: #{conv_bn_relu.2} parent=0 // pred_check
    _
  $region3: #{conv_bn_relu.2} parent=0 // pred_check_branch
    %11 = sbr.rel (0) target = $region5
  $region4: #{conv_bn_relu.2} parent=0 // pred_region
    _
  $region5: #{conv_bn_relu.2} parent=0 // pred_fallthru
    _
  // Predicated region
  $region6: #{conv_bn_relu.2} parent=0 // pred_check
    _
  $region7: #{conv_bn_relu.2} parent=0 // pred_check_branch
    %13 = sbr.rel (0) target = $region9
  $region8: #{conv_bn_relu.2} parent=0 // pred_region
    _
  $region9: #{conv_bn_relu.2} parent=0 // pred_fallthru
    _
  %v15 = vld [vmem:[%s0] sm:$0xff]
  %v16 = vld [vmem:[%s0 + $0x8] sm:$0xff]
  %v17 = vld [vmem:[%s0 + $0x10] sm:$0xff]
  %v18 = vld [vmem:[%s0 + $0x18] sm:$0xff]
  %v19 = vld [vmem:[%s0 + $0x20] sm:$0xff]
  %v20 = vld [vmem:[%s0 + $0x28] sm:$0xff]
  %v21 = vld [vmem:[%s0 + $0x30] sm:$0xff]
  %v22 = vld [vmem:[%s0 + $0x38] sm:$0xff]
  %v23 = vld [vmem:[%s0 + $0x40] sm:$0xff]
  %v24 = vld [vmem:[%s0 + $0x48] sm:$0x1]
  %v25 = vld [vmem:[%s0 + $0x50] sm:$0x1]
  %v26 = vld [vmem:[%s0 + $0x58] sm:$0x1]
  %v27 = vpack.c.bf16 %v18, %v15
  %v28 = vpack.c.bf16 %v19, %v16
  %v29 = vpack.c.bf16 %v20, %v17
  %v30 = vpack.c.bf16 %v24, %v21
  %v31 = vpack.c.bf16 %v25, %v22
  %v32 = vpack.c.bf16 %v26, %v23
  %v33 = vld [vmem:[%s0] sm:$0xe0]
  %v34 = vld [vmem:[%s0 + $0x8] sm:$0xe0]
  %v35 = vld [vmem:[%s0 + $0x10] sm:$0xe0]
  %v36 = vld [vmem:[%s0 + $0x48] sm:$0x3f]
  %v37 = vld [vmem:[%s0 + $0x50] sm:$0x3f]
  %v38 = vld [vmem:[%s0 + $0x58] sm:$0x3f]
  %v39 = vpack.c.bf16 %v18, %v33
  %v40 = vpack.c.bf16 %v19, %v34
  %v41 = vpack.c.bf16 %v20, %v35
  %v42 = vpack.c.bf16 %v36, %v21
  %v43 = vpack.c.bf16 %v37, %v22
  %v44 = vpack.c.bf16 %v38, %v23
  %v45 = vld [vmem:[%s0 + $0x18] sm:$0xfc]
  %v46 = vld [vmem:[%s0 + $0x20] sm:$0xfc]
  %v47 = vld [vmem:[%s0 + $0x28] sm:$0xfc]
  %v48 = vld [vmem:[%s0 + $0x48] sm:$0xff]
  %v49 = vld [vmem:[%s0 + $0x50] sm:$0xff]
  %v50 = vld [vmem:[%s0 + $0x58] sm:$0xff]
  %v51 = vld [vmem:[%s0 + $0x60] sm:$0x7]
  %v52 = vld [vmem:[%s0 + $0x68] sm:$0x7]
  %v53 = vld [vmem:[%s0 + $0x70] sm:$0x7]
  %v54 = vpack.c.bf16 %v21, %v45
  %v55 = vpack.c.bf16 %v22, %v46
  %v56 = vpack.c.bf16 %v23, %v47
  %v57 = vpack.c.bf16 %v51, %v48
  %v58 = vpack.c.bf16 %v52, %v49
  %v59 = vpack.c.bf16 %v53, %v50
  %v60 = vld [vmem:[%s1] sm:$0xff]
  %v61 = vld [vmem:[%s1 + $0x8] sm:$0xf]
  %v62 = vld [vmem:[%s1 + $0xc] sm:$0xff]
  %v63 = vld [vmem:[%s1 + $0x14] sm:$0xf]
  %v64 = vld [vmem:[%s1 + $0x18] sm:$0xff]
  %v65 = vld [vmem:[%s1 + $0x20] sm:$0xf]
  %v66 = vld [vmem:[%s1 + $0x24] sm:$0xff]
  %v67 = vld [vmem:[%s1 + $0x2c] sm:$0xf]
  %v68 = vld [vmem:[%s1 + $0x30] sm:$0xff]
  %v69 = vld [vmem:[%s1 + $0x38] sm:$0xf]
  %v70 = vld [vmem:[%s1 + $0x3c] sm:$0xff]
  %v71 = vld [vmem:[%s1 + $0x44] sm:$0xf]
  %v72 = vld [vmem:[%s1 + $0x48] sm:$0xff]
  %v73 = vld [vmem:[%s1 + $0x50] sm:$0xf]
  %v74 = vld [vmem:[%s1 + $0x54] sm:$0xff]
  %v75 = vld [vmem:[%s1 + $0x5c] sm:$0xf]
  %v76 = vld [vmem:[%s1 + $0x60] sm:$0xff]
  %v77 = vld [vmem:[%s1 + $0x68] sm:$0xf]
  %v78 = vld [vmem:[%s1 + $0x6c] sm:$0xff]
  %v79 = vld [vmem:[%s1 + $0x74] sm:$0xf]
  %v80 = vld [vmem:[%s1 + $0x78] sm:$0xff]
  %v81 = vld [vmem:[%s1 + $0x80] sm:$0xf]
  %v82 = vld [vmem:[%s1 + $0x84] sm:$0xff]
  %v83 = vld [vmem:[%s1 + $0x8c] sm:$0xf]
  %v84 = vld [vmem:[%s1 + $0x90] sm:$0xff]
  %v85 = vld [vmem:[%s1 + $0x98] sm:$0xf]
  %v86 = vld [vmem:[%s1 + $0x9c] sm:$0xff]
  %v87 = vld [vmem:[%s1 + $0xa4] sm:$0xf]
  %v88 = vld [vmem:[%s1 + $0xa8] sm:$0xff]
  %v89 = vld [vmem:[%s1 + $0xb0] sm:$0xf]
  %v90 = vld [vmem:[%s1 + $0xb4] sm:$0xff]
  %v91 = vld [vmem:[%s1 + $0xbc] sm:$0xf]
  %v92 = vld [vmem:[%s1 + $0xc0] sm:$0xff]
  %v93 = vld [vmem:[%s1 + $0xc8] sm:$0xf]
  %v94 = vld [vmem:[%s1 + $0xcc] sm:$0xff]
  %v95 = vld [vmem:[%s1 + $0xd4] sm:$0xf]
  %v96 = vld [vmem:[%s1 + $0xd8] sm:$0xff]
  %v97 = vld [vmem:[%s1 + $0xe0] sm:$0xf]
  %v98 = vld [vmem:[%s1 + $0xe4] sm:$0xff]
  %v99 = vld [vmem:[%s1 + $0xec] sm:$0xf]
  %v100 = vld [vmem:[%s1 + $0xf0] sm:$0xff]
  %v101 = vld [vmem:[%s1 + $0xf8] sm:$0xf]
  %v102 = vld [vmem:[%s1 + $0xfc] sm:$0xff]
  %v103 = vld [vmem:[%s1 + $0x104] sm:$0xf]
  %v104 = vld [vmem:[%s1 + $0x108] sm:$0xff]
  %v105 = vld [vmem:[%s1 + $0x110] sm:$0xf]
  %v106 = vld [vmem:[%s1 + $0x114] sm:$0xff]
  %v107 = vld [vmem:[%s1 + $0x11c] sm:$0xf]
  %v108 = vld [vmem:[%s1 + $0x120] sm:$0xff]
  %v109 = vld [vmem:[%s1 + $0x128] sm:$0xf]
  %v110 = vld [vmem:[%s1 + $0x12c] sm:$0xff]
  %v111 = vld [vmem:[%s1 + $0x134] sm:$0xf]
  %v112 = vld [vmem:[%s1 + $0x138] sm:$0xff]
  %v113 = vld [vmem:[%s1 + $0x140] sm:$0xf]
  %v114 = vld [vmem:[%s1 + $0x144] sm:$0xff]
  %v115 = vld [vmem:[%s1 + $0x14c] sm:$0xf]
  %v116 = vld [vmem:[%s1 + $0x150] sm:$0xff]
  %v117 = vld [vmem:[%s1 + $0x158] sm:$0xf]
  %v118 = vld [vmem:[%s1 + $0x15c] sm:$0xff]
  %v119 = vld [vmem:[%s1 + $0x164] sm:$0xf]
  %v120 = vld [vmem:[%s1 + $0x168] sm:$0xff]
  %v121 = vld [vmem:[%s1 + $0x170] sm:$0xf]
  %v122 = vld [vmem:[%s1 + $0x174] sm:$0xff]
  %v123 = vld [vmem:[%s1 + $0x17c] sm:$0xf]
  %v124 = vld [vmem:[%s1 + $0x180] sm:$0xff]
  %v125 = vld [vmem:[%s1 + $0x188] sm:$0xf]
  %v126 = vld [vmem:[%s1 + $0x18c] sm:$0xff]
  %v127 = vld [vmem:[%s1 + $0x194] sm:$0xf]
  %v128 = vld [vmem:[%s1 + $0x198] sm:$0xff]
  %v129 = vld [vmem:[%s1 + $0x1a0] sm:$0xf]
  %v130 = vld [vmem:[%s1 + $0x1a4] sm:$0xff]
  %v131 = vld [vmem:[%s1 + $0x1ac] sm:$0xf]
  %v132 = vld [vmem:[%s1 + $0x1b0] sm:$0xff]
  %v133 = vld [vmem:[%s1 + $0x1b8] sm:$0xf]
  %v134 = vld [vmem:[%s1 + $0x1bc] sm:$0xff]
  %v135 = vld [vmem:[%s1 + $0x1c4] sm:$0xf]
  %v136 = vld [vmem:[%s1 + $0x1c8] sm:$0xff]
  %v137 = vld [vmem:[%s1 + $0x1d0] sm:$0xf]
  %v138 = vld [vmem:[%s1 + $0x1d4] sm:$0xff]
  %v139 = vld [vmem:[%s1 + $0x1dc] sm:$0xf]
  %v140 = vld [vmem:[%s1 + $0x1e0] sm:$0xff]
  %v141 = vld [vmem:[%s1 + $0x1e8] sm:$0xf]
  %v142 = vld [vmem:[%s1 + $0x1ec] sm:$0xff]
  %v143 = vld [vmem:[%s1 + $0x1f4] sm:$0xf]
  %v144 = vld [vmem:[%s1 + $0x1f8] sm:$0xff]
  %v145 = vld [vmem:[%s1 + $0x200] sm:$0xf]
  %v146 = vld [vmem:[%s1 + $0x204] sm:$0xff]
  %v147 = vld [vmem:[%s1 + $0x20c] sm:$0xf]
  %v148 = vld [vmem:[%s1 + $0x210] sm:$0xff]
  %v149 = vld [vmem:[%s1 + $0x218] sm:$0xf]
  %v150 = vld [vmem:[%s1 + $0x21c] sm:$0xff]
  %v151 = vld [vmem:[%s1 + $0x224] sm:$0xf]
  %v152 = vld [vmem:[%s1 + $0x228] sm:$0xff]
  %v153 = vld [vmem:[%s1 + $0x230] sm:$0xf]
  %v154 = vld [vmem:[%s1 + $0x234] sm:$0xff]
  %v155 = vld [vmem:[%s1 + $0x23c] sm:$0xf]
  %s156 = scalar_lea.vmem %s1, 576
  %v157 = vld [vmem:[%s156] sm:$0xff]
  %v158 = vld [vmem:[%s156 + $0x8] sm:$0xf]
  %v159 = vld [vmem:[%s156 + $0xc] sm:$0xff]
  %v160 = vld [vmem:[%s156 + $0x14] sm:$0xf]
  %v161 = vld [vmem:[%s156 + $0x18] sm:$0xff]
  %v162 = vld [vmem:[%s156 + $0x20] sm:$0xf]
  %v163 = vld [vmem:[%s156 + $0x24] sm:$0xff]
  %v164 = vld [vmem:[%s156 + $0x2c] sm:$0xf]
  %v165 = vld [vmem:[%s156 + $0x30] sm:$0xff]
  %v166 = vld [vmem:[%s156 + $0x38] sm:$0xf]
  %v167 = vld [vmem:[%s156 + $0x3c] sm:$0xff]
  %v168 = vld [vmem:[%s156 + $0x44] sm:$0xf]
  %v169 = vld [vmem:[%s156 + $0x48] sm:$0xff]
  %v170 = vld [vmem:[%s156 + $0x50] sm:$0xf]
  %v171 = vld [vmem:[%s156 + $0x54] sm:$0xff]
  %v172 = vld [vmem:[%s156 + $0x5c] sm:$0xf]
  %v173 = vld [vmem:[%s156 + $0x60] sm:$0xff]
  %v174 = vld [vmem:[%s156 + $0x68] sm:$0xf]
  %v175 = vld [vmem:[%s156 + $0x6c] sm:$0xff]
  %v176 = vld [vmem:[%s156 + $0x74] sm:$0xf]
  %v177 = vld [vmem:[%s156 + $0x78] sm:$0xff]
  %v178 = vld [vmem:[%s156 + $0x80] sm:$0xf]
  %v179 = vld [vmem:[%s156 + $0x84] sm:$0xff]
  %v180 = vld [vmem:[%s156 + $0x8c] sm:$0xf]
  %v181 = vld [vmem:[%s156 + $0x90] sm:$0xff]
  %v182 = vld [vmem:[%s156 + $0x98] sm:$0xf]
  %v183 = vld [vmem:[%s156 + $0x9c] sm:$0xff]
  %v184 = vld [vmem:[%s156 + $0xa4] sm:$0xf]
  %v185 = vld [vmem:[%s156 + $0xa8] sm:$0xff]
  %v186 = vld [vmem:[%s156 + $0xb0] sm:$0xf]
  %v187 = vld [vmem:[%s156 + $0xb4] sm:$0xff]
  %v188 = vld [vmem:[%s156 + $0xbc] sm:$0xf]
  %v189 = vld [vmem:[%s156 + $0xc0] sm:$0xff]
  %v190 = vld [vmem:[%s156 + $0xc8] sm:$0xf]
  %v191 = vld [vmem:[%s156 + $0xcc] sm:$0xff]
  %v192 = vld [vmem:[%s156 + $0xd4] sm:$0xf]
  %v193 = vld [vmem:[%s156 + $0xd8] sm:$0xff]
  %v194 = vld [vmem:[%s156 + $0xe0] sm:$0xf]
  %v195 = vld [vmem:[%s156 + $0xe4] sm:$0xff]
  %v196 = vld [vmem:[%s156 + $0xec] sm:$0xf]
  %v197 = vld [vmem:[%s156 + $0xf0] sm:$0xff]
  %v198 = vld [vmem:[%s156 + $0xf8] sm:$0xf]
  %v199 = vld [vmem:[%s156 + $0xfc] sm:$0xff]
  %v200 = vld [vmem:[%s156 + $0x104] sm:$0xf]
  %v201 = vld [vmem:[%s156 + $0x108] sm:$0xff]
  %v202 = vld [vmem:[%s156 + $0x110] sm:$0xf]
  %v203 = vld [vmem:[%s156 + $0x114] sm:$0xff]
  %v204 = vld [vmem:[%s156 + $0x11c] sm:$0xf]
  %v205 = vld [vmem:[%s156 + $0x120] sm:$0xff]
  %v206 = vld [vmem:[%s156 + $0x128] sm:$0xf]
  %v207 = vld [vmem:[%s156 + $0x12c] sm:$0xff]
  %v208 = vld [vmem:[%s156 + $0x134] sm:$0xf]
  %v209 = vld [vmem:[%s156 + $0x138] sm:$0xff]
  %v210 = vld [vmem:[%s156 + $0x140] sm:$0xf]
  %v211 = vld [vmem:[%s156 + $0x144] sm:$0xff]
  %v212 = vld [vmem:[%s156 + $0x14c] sm:$0xf]
  %v213 = vld [vmem:[%s156 + $0x150] sm:$0xff]
  %v214 = vld [vmem:[%s156 + $0x158] sm:$0xf]
  %v215 = vld [vmem:[%s156 + $0x15c] sm:$0xff]
  %v216 = vld [vmem:[%s156 + $0x164] sm:$0xf]
  %v217 = vld [vmem:[%s156 + $0x168] sm:$0xff]
  %v218 = vld [vmem:[%s156 + $0x170] sm:$0xf]
  %v219 = vld [vmem:[%s156 + $0x174] sm:$0xff]
  %v220 = vld [vmem:[%s156 + $0x17c] sm:$0xf]
  %v221 = vld [vmem:[%s156 + $0x180] sm:$0xff]
  %v222 = vld [vmem:[%s156 + $0x188] sm:$0xf]
  %v223 = vld [vmem:[%s156 + $0x18c] sm:$0xff]
  %v224 = vld [vmem:[%s156 + $0x194] sm:$0xf]
  %v225 = vld [vmem:[%s156 + $0x198] sm:$0xff]
  %v226 = vld [vmem:[%s156 + $0x1a0] sm:$0xf]
  %v227 = vld [vmem:[%s156 + $0x1a4] sm:$0xff]
  %v228 = vld [vmem:[%s156 + $0x1ac] sm:$0xf]
  %v229 = vld [vmem:[%s156 + $0x1b0] sm:$0xff]
  %v230 = vld [vmem:[%s156 + $0x1b8] sm:$0xf]
  %v231 = vld [vmem:[%s156 + $0x1bc] sm:$0xff]
  %v232 = vld [vmem:[%s156 + $0x1c4] sm:$0xf]
  %v233 = vld [vmem:[%s156 + $0x1c8] sm:$0xff]
  %v234 = vld [vmem:[%s156 + $0x1d0] sm:$0xf]
  %v235 = vld [vmem:[%s156 + $0x1d4] sm:$0xff]
  %v236 = vld [vmem:[%s156 + $0x1dc] sm:$0xf]
  %v237 = vld [vmem:[%s156 + $0x1e0] sm:$0xff]
  %v238 = vld [vmem:[%s156 + $0x1e8] sm:$0xf]
  %v239 = vld [vmem:[%s156 + $0x1ec] sm:$0xff]
  %v240 = vld [vmem:[%s156 + $0x1f4] sm:$0xf]
  %v241 = vld [vmem:[%s156 + $0x1f8] sm:$0xff]
  %v242 = vld [vmem:[%s156 + $0x200] sm:$0xf]
  %v243 = vld [vmem:[%s156 + $0x204] sm:$0xff]
  %v244 = vld [vmem:[%s156 + $0x20c] sm:$0xf]
  %v245 = vld [vmem:[%s156 + $0x210] sm:$0xff]
  %v246 = vld [vmem:[%s156 + $0x218] sm:$0xf]
  %v247 = vld [vmem:[%s156 + $0x21c] sm:$0xff]
  %v248 = vld [vmem:[%s156 + $0x224] sm:$0xf]
  %v249 = vld [vmem:[%s156 + $0x228] sm:$0xff]
  %v250 = vld [vmem:[%s156 + $0x230] sm:$0xf]
  %v251 = vld [vmem:[%s156 + $0x234] sm:$0xff]
  %v252 = vld [vmem:[%s156 + $0x23c] sm:$0xf]
  %vm253 = vsmask.f32 5376
  %v255 = vshrl.u32 %v39, 16
  %v257 = vrot.slane %v255, 2
  %v258 = vshll.u32 %v39, 16
  %v260 = vrot.slane %v258, 3
  %v261 = vor.u32 %v257, %v260
  %v263 = vshrl.u32 %v42, 16
  %v265 = vrot.slane %v263, 2
  %v266 = vshll.u32 %v42, 16
  %v268 = vrot.slane %v266, 3
  %v269 = vor.u32 %v265, %v268
  %v270 = vsel %vm253, %v261, %v269
  %v272 = vshrl.u32 %v40, 16
  %v274 = vrot.slane %v272, 2
  %v275 = vshll.u32 %v40, 16
  %v277 = vrot.slane %v275, 3
  %v278 = vor.u32 %v274, %v277
  %v280 = vshrl.u32 %v43, 16
  %v282 = vrot.slane %v280, 2
  %v283 = vshll.u32 %v43, 16
  %v285 = vrot.slane %v283, 3
  %v286 = vor.u32 %v282, %v285
  %v287 = vsel %vm253, %v278, %v286
  %v289 = vshrl.u32 %v41, 16
  %v291 = vrot.slane %v289, 2
  %v292 = vshll.u32 %v41, 16
  %v294 = vrot.slane %v292, 3
  %v295 = vor.u32 %v291, %v294
  %v297 = vshrl.u32 %v44, 16
  %v299 = vrot.slane %v297, 2
  %v300 = vshll.u32 %v44, 16
  %v302 = vrot.slane %v300, 3
  %v303 = vor.u32 %v299, %v302
  %v304 = vsel %vm253, %v295, %v303
  %v407 = vunpack.c.l.b16 %v157
  %v408 = vunpack.c.h.b16 %v157
  %v409 = vunpack.c.l.b16 %v158
  %v410 = vunpack.c.l.b16 %v159
  %v411 = vunpack.c.h.b16 %v159
  %v412 = vunpack.c.l.b16 %v160
  %v413 = vunpack.c.l.b16 %v161
  %v414 = vunpack.c.h.b16 %v161
  %v415 = vunpack.c.l.b16 %v162
  %v416 = vunpack.c.l.b16 %v163
  %v417 = vunpack.c.h.b16 %v163
  %v418 = vunpack.c.l.b16 %v164
  %v419 = vunpack.c.l.b16 %v165
  %v420 = vunpack.c.h.b16 %v165
  %v421 = vunpack.c.l.b16 %v166
  %v422 = vunpack.c.l.b16 %v167
  %v423 = vunpack.c.h.b16 %v167
  %v424 = vunpack.c.l.b16 %v168
  %v425 = vunpack.c.l.b16 %v169
  %v426 = vunpack.c.h.b16 %v169
  %v427 = vunpack.c.l.b16 %v170
  %v428 = vunpack.c.l.b16 %v171
  %v429 = vunpack.c.h.b16 %v171
  %v430 = vunpack.c.l.b16 %v172
  %v431 = vunpack.c.l.b16 %v173
  %v432 = vunpack.c.h.b16 %v173
  %v433 = vunpack.c.l.b16 %v174
  %v434 = vunpack.c.l.b16 %v175
  %v435 = vunpack.c.h.b16 %v175
  %v436 = vunpack.c.l.b16 %v176
  %v437 = vunpack.c.l.b16 %v177
  %v438 = vunpack.c.h.b16 %v177
  %v439 = vunpack.c.l.b16 %v178
  %v440 = vunpack.c.l.b16 %v179
  %v441 = vunpack.c.h.b16 %v179
  %v442 = vunpack.c.l.b16 %v180
  %v443 = vunpack.c.l.b16 %v181
  %v444 = vunpack.c.h.b16 %v181
  %v445 = vunpack.c.l.b16 %v182
  %v446 = vunpack.c.l.b16 %v183
  %v447 = vunpack.c.h.b16 %v183
  %v448 = vunpack.c.l.b16 %v184
  %v449 = vunpack.c.l.b16 %v185
  %v450 = vunpack.c.h.b16 %v185
  %v451 = vunpack.c.l.b16 %v186
  %v452 = vunpack.c.l.b16 %v187
  %v453 = vunpack.c.h.b16 %v187
  %v454 = vunpack.c.l.b16 %v188
  %v455 = vunpack.c.l.b16 %v189
  %v456 = vunpack.c.h.b16 %v189
  %v457 = vunpack.c.l.b16 %v190
  %v458 = vunpack.c.l.b16 %v191
  %v459 = vunpack.c.h.b16 %v191
  %v460 = vunpack.c.l.b16 %v192
  %v461 = vunpack.c.l.b16 %v193
  %v462 = vunpack.c.h.b16 %v193
  %v463 = vunpack.c.l.b16 %v194
  %v464 = vunpack.c.l.b16 %v195
  %v465 = vunpack.c.h.b16 %v195
  %v466 = vunpack.c.l.b16 %v196
  %v467 = vunpack.c.l.b16 %v197
  %v468 = vunpack.c.h.b16 %v197
  %v469 = vunpack.c.l.b16 %v198
  %v470 = vunpack.c.l.b16 %v199
  %v471 = vunpack.c.h.b16 %v199
  %v472 = vunpack.c.l.b16 %v200
  %v473 = vunpack.c.l.b16 %v201
  %v474 = vunpack.c.h.b16 %v201
  %v475 = vunpack.c.l.b16 %v202
  %v476 = vunpack.c.l.b16 %v203
  %v477 = vunpack.c.h.b16 %v203
  %v478 = vunpack.c.l.b16 %v204
  %v479 = vunpack.c.l.b16 %v205
  %v480 = vunpack.c.h.b16 %v205
  %v481 = vunpack.c.l.b16 %v206
  %v482 = vunpack.c.l.b16 %v207
  %v483 = vunpack.c.h.b16 %v207
  %v484 = vunpack.c.l.b16 %v208
  %v485 = vunpack.c.l.b16 %v209
  %v486 = vunpack.c.h.b16 %v209
  %v487 = vunpack.c.l.b16 %v210
  %v488 = vunpack.c.l.b16 %v211
  %v489 = vunpack.c.h.b16 %v211
  %v490 = vunpack.c.l.b16 %v212
  %v491 = vunpack.c.l.b16 %v213
  %v492 = vunpack.c.h.b16 %v213
  %v493 = vunpack.c.l.b16 %v214
  %v494 = vunpack.c.l.b16 %v215
  %v495 = vunpack.c.h.b16 %v215
  %v496 = vunpack.c.l.b16 %v216
  %v497 = vunpack.c.l.b16 %v217
  %v498 = vunpack.c.h.b16 %v217
  %v499 = vunpack.c.l.b16 %v218
  %v500 = vunpack.c.l.b16 %v219
  %v501 = vunpack.c.h.b16 %v219
  %v502 = vunpack.c.l.b16 %v220
  %v503 = vunpack.c.l.b16 %v221
  %v504 = vunpack.c.h.b16 %v221
  %v505 = vunpack.c.l.b16 %v222
  %v506 = vunpack.c.l.b16 %v223
  %v507 = vunpack.c.h.b16 %v223
  %v508 = vunpack.c.l.b16 %v224
  %v509 = vunpack.c.l.b16 %v225
  %v510 = vunpack.c.h.b16 %v225
  %v511 = vunpack.c.l.b16 %v226
  %v512 = vunpack.c.l.b16 %v227
  %v513 = vunpack.c.h.b16 %v227
  %v514 = vunpack.c.l.b16 %v228
  %v515 = vunpack.c.l.b16 %v229
  %v516 = vunpack.c.h.b16 %v229
  %v517 = vunpack.c.l.b16 %v230
  %v518 = vunpack.c.l.b16 %v231
  %v519 = vunpack.c.h.b16 %v231
  %v520 = vunpack.c.l.b16 %v232
  %v521 = vunpack.c.l.b16 %v233
  %v522 = vunpack.c.h.b16 %v233
  %v523 = vunpack.c.l.b16 %v234
  %v524 = vunpack.c.l.b16 %v235
  %v525 = vunpack.c.h.b16 %v235
  %v526 = vunpack.c.l.b16 %v236
  %v527 = vunpack.c.l.b16 %v237
  %v528 = vunpack.c.h.b16 %v237
  %v529 = vunpack.c.l.b16 %v238
  %v530 = vunpack.c.l.b16 %v239
  %v531 = vunpack.c.h.b16 %v239
  %v532 = vunpack.c.l.b16 %v240
  %v533 = vunpack.c.l.b16 %v241
  %v534 = vunpack.c.h.b16 %v241
  %v535 = vunpack.c.l.b16 %v242
  %v536 = vunpack.c.l.b16 %v243
  %v537 = vunpack.c.h.b16 %v243
  %v538 = vunpack.c.l.b16 %v244
  %v539 = vunpack.c.l.b16 %v245
  %v540 = vunpack.c.h.b16 %v245
  %v541 = vunpack.c.l.b16 %v246
  %v542 = vunpack.c.l.b16 %v247
  %v543 = vunpack.c.h.b16 %v247
  %v544 = vunpack.c.l.b16 %v248
  %v545 = vunpack.c.l.b16 %v249
  %v546 = vunpack.c.h.b16 %v249
  %v547 = vunpack.c.l.b16 %v250
  %v548 = vunpack.c.l.b16 %v251
  %v549 = vunpack.c.h.b16 %v251
  %v550 = vunpack.c.l.b16 %v252
  %v551 = vpack.c.b16 %v410, %v407
  %v552 = vpack.c.b16 %v411, %v408
  %v553 = vpack.c.b16 %v412, %v409
  %v554 = vpack.c.b16 %v416, %v413
  %v555 = vpack.c.b16 %v417, %v414
  %v556 = vpack.c.b16 %v418, %v415
  %v557 = vpack.c.b16 %v422, %v419
  %v558 = vpack.c.b16 %v423, %v420
  %v559 = vpack.c.b16 %v424, %v421
  %v560 = vpack.c.b16 %v428, %v425
  %v561 = vpack.c.b16 %v429, %v426
  %v562 = vpack.c.b16 %v430, %v427
  %v563 = vpack.c.b16 %v434, %v431
  %v564 = vpack.c.b16 %v435, %v432
  %v565 = vpack.c.b16 %v436, %v433
  %v566 = vpack.c.b16 %v440, %v437
  %v567 = vpack.c.b16 %v441, %v438
  %v568 = vpack.c.b16 %v442, %v439
  %v569 = vpack.c.b16 %v446, %v443
  %v570 = vpack.c.b16 %v447, %v444
  %v571 = vpack.c.b16 %v448, %v445
  %v572 = vpack.c.b16 %v452, %v449
  %v573 = vpack.c.b16 %v453, %v450
  %v574 = vpack.c.b16 %v454, %v451
  %v575 = vpack.c.b16 %v458, %v455
  %v576 = vpack.c.b16 %v459, %v456
  %v577 = vpack.c.b16 %v460, %v457
  %v578 = vpack.c.b16 %v464, %v461
  %v579 = vpack.c.b16 %v465, %v462
  %v580 = vpack.c.b16 %v466, %v463
  %v581 = vpack.c.b16 %v470, %v467
  %v582 = vpack.c.b16 %v471, %v468
  %v583 = vpack.c.b16 %v472, %v469
  %v584 = vpack.c.b16 %v476, %v473
  %v585 = vpack.c.b16 %v477, %v474
  %v586 = vpack.c.b16 %v478, %v475
  %v587 = vpack.c.b16 %v482, %v479
  %v588 = vpack.c.b16 %v483, %v480
  %v589 = vpack.c.b16 %v484, %v481
  %v590 = vpack.c.b16 %v488, %v485
  %v591 = vpack.c.b16 %v489, %v486
  %v592 = vpack.c.b16 %v490, %v487
  %v593 = vpack.c.b16 %v494, %v491
  %v594 = vpack.c.b16 %v495, %v492
  %v595 = vpack.c.b16 %v496, %v493
  %v596 = vpack.c.b16 %v500, %v497
  %v597 = vpack.c.b16 %v501, %v498
  %v598 = vpack.c.b16 %v502, %v499
  %v599 = vpack.c.b16 %v506, %v503
  %v600 = vpack.c.b16 %v507, %v504
  %v601 = vpack.c.b16 %v508, %v505
  %v602 = vpack.c.b16 %v512, %v509
  %v603 = vpack.c.b16 %v513, %v510
  %v604 = vpack.c.b16 %v514, %v511
  %v605 = vpack.c.b16 %v518, %v515
  %v606 = vpack.c.b16 %v519, %v516
  %v607 = vpack.c.b16 %v520, %v517
  %v608 = vpack.c.b16 %v524, %v521
  %v609 = vpack.c.b16 %v525, %v522
  %v610 = vpack.c.b16 %v526, %v523
  %v611 = vpack.c.b16 %v530, %v527
  %v612 = vpack.c.b16 %v531, %v528
  %v613 = vpack.c.b16 %v532, %v529
  %v614 = vpack.c.b16 %v536, %v533
  %v615 = vpack.c.b16 %v537, %v534
  %v616 = vpack.c.b16 %v538, %v535
  %v617 = vpack.c.b16 %v542, %v539
  %v618 = vpack.c.b16 %v543, %v540
  %v619 = vpack.c.b16 %v544, %v541
  %v620 = vpack.c.b16 %v548, %v545
  %v621 = vpack.c.b16 %v549, %v546
  %v622 = vpack.c.b16 %v550, %v547
  %695 = vmatprep.subr.bf16.mxu0 %v552
  %696 = vmatpush1.bf16.msra.mxu0 %v551
  %697 = vmatprep.subr.bf16.mxu0 %v555
  %698 = vmatpush1.bf16.msra.mxu0 %v554
  %699 = vmatprep.subr.bf16.mxu0 %v558
  %700 = vmatpush1.bf16.msra.mxu0 %v557
  %701 = vmatprep.subr.bf16.mxu0 %v561
  %702 = vmatpush1.bf16.msra.mxu0 %v560
  %703 = vmatprep.subr.bf16.mxu0 %v564
  %704 = vmatpush1.bf16.msra.mxu0 %v563
  %705 = vmatprep.subr.bf16.mxu0 %v567
  %706 = vmatpush1.bf16.msra.mxu0 %v566
  %707 = vmatprep.subr.bf16.mxu0 %v570
  %708 = vmatpush1.bf16.msra.mxu0 %v569
  %709 = vmatprep.subr.bf16.mxu0 %v573
  %710 = vmatpush1.bf16.msra.mxu0 %v572
  %711 = vmatprep.subr.bf16.mxu0 %v576
  %712 = vmatpush1.bf16.msra.mxu0 %v575
  %713 = vmatprep.subr.bf16.mxu0 %v579
  %714 = vmatpush1.bf16.msra.mxu0 %v578
  %715 = vmatprep.subr.bf16.mxu0 %v582
  %716 = vmatpush1.bf16.msra.mxu0 %v581
  %717 = vmatprep.subr.bf16.mxu0 %v585
  %718 = vmatpush1.bf16.msra.mxu0 %v584
  %719 = vmatprep.subr.bf16.mxu0 %v588
  %720 = vmatpush1.bf16.msra.mxu0 %v587
  %721 = vmatprep.subr.bf16.mxu0 %v591
  %722 = vmatpush1.bf16.msra.mxu0 %v590
  %723 = vmatprep.subr.bf16.mxu0 %v594
  %724 = vmatpush1.bf16.msra.mxu0 %v593
  %725 = vmatprep.subr.bf16.mxu0 %v597
  %726 = vmatpush1.bf16.msra.mxu0 %v596
  %727 = vmatprep.mubr.bf16.mxu0 %v287
  %728 = vmatmul.mubr.bf16.gmra.mrb[0].mxu0 %v270
  %v729 = vpop.f32.mrb[0].mxu0
  %v730 = vadd.f32 0.0, %v729
  %v731 = vpop.f32.mrb[0].mxu0
  %v732 = vadd.f32 0.0, %v731
  %v733 = vpop.f32.mrb[0].mxu0
  %v734 = vadd.f32 0.0, %v733
  %v735 = vpop.f32.mrb[0].mxu0
  %v736 = vadd.f32 0.0, %v735
  %737 = vmatprep.mubr.bf16.mxu0 %v286
  %738 = vmatmul.mubr.bf16.gmra.mrb[0].mxu0 %v269
  %v739 = vpop.f32.mrb[0].mxu0
  %v740 = vadd.f32 0.0, %v739
  %v741 = vpop.f32.mrb[0].mxu0
  %v742 = vadd.f32 0.0, %v741
  %v743 = vpop.f32.mrb[0].mxu0
  %v744 = vadd.f32 0.0, %v743
  %v745 = vpop.f32.mrb[0].mxu0
  %v746 = vadd.f32 0.0, %v745
  %747 = vdwg.mxu0
  %748 = vmatprep.subr.bf16.mxu0 %v600
  %749 = vmatpush1.bf16.msra.mxu0 %v599
  %750 = vmatprep.subr.bf16.mxu0 %v603
  %751 = vmatpush1.bf16.msra.mxu0 %v602
  %752 = vmatprep.subr.bf16.mxu0 %v606
  %753 = vmatpush1.bf16.msra.mxu0 %v605
  %754 = vmatprep.subr.bf16.mxu0 %v609
  %755 = vmatpush1.bf16.msra.mxu0 %v608
  %756 = vmatprep.subr.bf16.mxu0 %v612
  %757 = vmatpush1.bf16.msra.mxu0 %v611
  %758 = vmatprep.subr.bf16.mxu0 %v615
  %759 = vmatpush1.bf16.msra.mxu0 %v614
  %760 = vmatprep.subr.bf16.mxu0 %v618
  %761 = vmatpush1.bf16.msra.mxu0 %v617
  %762 = vmatprep.subr.bf16.mxu0 %v621
  %763 = vmatpush1.bf16.msra.mxu0 %v620
  %764 = vmatprep.subr.bf16.mxu0 0
  %765 = vmatpush1.bf16.msra.mxu0 0
  %766 = vmatprep.subr.bf16.mxu0 0
  %767 = vmatpush1.bf16.msra.mxu0 0
  %768 = vmatprep.subr.bf16.mxu0 0
  %769 = vmatpush1.bf16.msra.mxu0 0
  %770 = vmatprep.subr.bf16.mxu0 0
  %771 = vmatpush1.bf16.msra.mxu0 0
  %772 = vmatprep.subr.bf16.mxu0 0
  %773 = vmatpush1.bf16.msra.mxu0 0
  %774 = vmatprep.subr.bf16.mxu0 0
  %775 = vmatpush1.bf16.msra.mxu0 0
  %776 = vmatprep.subr.bf16.mxu0 0
  %777 = vmatpush1.bf16.msra.mxu0 0
  %778 = vmatprep.subr.bf16.mxu0 0
  %779 = vmatpush1.bf16.msra.mxu0 0
  %780 = vmatprep.mubr.bf16.mxu0 0
  %781 = vmatmul.mubr.bf16.gmra.mrb[0].mxu0 %v304
  %v782 = vpop.f32.mrb[0].mxu0
  %v783 = vadd.f32 %v730, %v782
  %v784 = vpop.f32.mrb[0].mxu0
  %v785 = vadd.f32 %v732, %v784
  %v786 = vpop.f32.mrb[0].mxu0
  %v787 = vadd.f32 %v734, %v786
  %v788 = vpop.f32.mrb[0].mxu0
  %v789 = vadd.f32 %v736, %v788
  %790 = vmatprep.mubr.bf16.mxu0 0
  %791 = vmatmul.mubr.bf16.gmra.mrb[0].mxu0 %v303
  %v792 = vpop.f32.mrb[0].mxu0
  %v793 = vadd.f32 %v740, %v792
  %v794 = vpop.f32.mrb[0].mxu0
  %v795 = vadd.f32 %v742, %v794
  %v796 = vpop.f32.mrb[0].mxu0
  %v797 = vadd.f32 %v744, %v796
  %v798 = vpop.f32.mrb[0].mxu0
  %v799 = vadd.f32 %v746, %v798
  %800 = vdwg.mxu0
  %801 = vmatprep.subr.bf16.mxu0 0
  %802 = vmatpush1.bf16.msra.mxu0 %v553
  %803 = vmatprep.subr.bf16.mxu0 0
  %804 = vmatpush1.bf16.msra.mxu0 %v556
  %805 = vmatprep.subr.bf16.mxu0 0
  %806 = vmatpush1.bf16.msra.mxu0 %v559
  %807 = vmatprep.subr.bf16.mxu0 0
  %808 = vmatpush1.bf16.msra.mxu0 %v562
  %809 = vmatprep.subr.bf16.mxu0 0
  %810 = vmatpush1.bf16.msra.mxu0 %v565
  %811 = vmatprep.subr.bf16.mxu0 0
  %812 = vmatpush1.bf16.msra.mxu0 %v568
  %813 = vmatprep.subr.bf16.mxu0 0
  %814 = vmatpush1.bf16.msra.mxu0 %v571
  %815 = vmatprep.subr.bf16.mxu0 0
  %816 = vmatpush1.bf16.msra.mxu0 %v574
  %817 = vmatprep.subr.bf16.mxu0 0
  %818 = vmatpush1.bf16.msra.mxu0 %v577
  %819 = vmatprep.subr.bf16.mxu0 0
  %820 = vmatpush1.bf16.msra.mxu0 %v580
  %821 = vmatprep.subr.bf16.mxu0 0
  %822 = vmatpush1.bf16.msra.mxu0 %v583
  %823 = vmatprep.subr.bf16.mxu0 0
  %824 = vmatpush1.bf16.msra.mxu0 %v586
  %825 = vmatprep.subr.bf16.mxu0 0
  %826 = vmatpush1.bf16.msra.mxu0 %v589
  %827 = vmatprep.subr.bf16.mxu0 0
  %828 = vmatpush1.bf16.msra.mxu0 %v592
  %829 = vmatprep.subr.bf16.mxu0 0
  %830 = vmatpush1.bf16.msra.mxu0 %v595
  %831 = vmatprep.subr.bf16.mxu0 0
  %832 = vmatpush1.bf16.msra.mxu0 %v598
  %833 = vmatprep.mubr.bf16.mxu0 %v287
  %834 = vmatmul.mubr.bf16.gmra.mrb[0].mxu0 %v270
  %v835 = vpop.f32.mrb[0].mxu0
  %v836 = vadd.f32 0.0, %v835
  %v837 = vpop.f32.mrb[0].mxu0
  %v838 = vpop.f32.mrb[0].mxu0
  %v839 = vadd.f32 0.0, %v838
  %v840 = vpop.f32.mrb[0].mxu0
  %841 = vmatprep.mubr.bf16.mxu0 %v286
  %842 = vmatmul.mubr.bf16.gmra.mrb[0].mxu0 %v269
  %v843 = vpop.f32.mrb[0].mxu0
  %v844 = vadd.f32 0.0, %v843
  %v845 = vpop.f32.mrb[0].mxu0
  %v846 = vpop.f32.mrb[0].mxu0
  %v847 = vadd.f32 0.0, %v846
  %v848 = vpop.f32.mrb[0].mxu0
  %849 = vdwg.mxu0
  %850 = vmatprep.subr.bf16.mxu0 0
  %851 = vmatpush1.bf16.msra.mxu0 %v601
  %852 = vmatprep.subr.bf16.mxu0 0
  %853 = vmatpush1.bf16.msra.mxu0 %v604
  %854 = vmatprep.subr.bf16.mxu0 0
  %855 = vmatpush1.bf16.msra.mxu0 %v607
  %856 = vmatprep.subr.bf16.mxu0 0
  %857 = vmatpush1.bf16.msra.mxu0 %v610
  %858 = vmatprep.subr.bf16.mxu0 0
  %859 = vmatpush1.bf16.msra.mxu0 %v613
  %860 = vmatprep.subr.bf16.mxu0 0
  %861 = vmatpush1.bf16.msra.mxu0 %v616
  %862 = vmatprep.subr.bf16.mxu0 0
  %863 = vmatpush1.bf16.msra.mxu0 %v619
  %864 = vmatprep.subr.bf16.mxu0 0
  %865 = vmatpush1.bf16.msra.mxu0 %v622
  %866 = vmatprep.subr.bf16.mxu0 0
  %867 = vmatpush1.bf16.msra.mxu0 0
  %868 = vmatprep.subr.bf16.mxu0 0
  %869 = vmatpush1.bf16.msra.mxu0 0
  %870 = vmatprep.subr.bf16.mxu0 0
  %871 = vmatpush1.bf16.msra.mxu0 0
  %872 = vmatprep.subr.bf16.mxu0 0
  %873 = vmatpush1.bf16.msra.mxu0 0
  %874 = vmatprep.subr.bf16.mxu0 0
  %875 = vmatpush1.bf16.msra.mxu0 0
  %876 = vmatprep.subr.bf16.mxu0 0
  %877 = vmatpush1.bf16.msra.mxu0 0
  %878 = vmatprep.subr.bf16.mxu0 0
  %879 = vmatpush1.bf16.msra.mxu0 0
  %880 = vmatprep.subr.bf16.mxu0 0
  %881 = vmatpush1.bf16.msra.mxu0 0
  %882 = vmatprep.mubr.bf16.mxu0 0
  %883 = vmatmul.mubr.bf16.gmra.mrb[0].mxu0 %v304
  %v884 = vpop.f32.mrb[0].mxu0
  %v885 = vadd.f32 %v836, %v884
  %v886 = vpop.f32.mrb[0].mxu0
  %v887 = vpop.f32.mrb[0].mxu0
  %v888 = vadd.f32 %v839, %v887
  %v889 = vpop.f32.mrb[0].mxu0
  %890 = vmatprep.mubr.bf16.mxu0 0
  %891 = vmatmul.mubr.bf16.gmra.mrb[0].mxu0 %v303
  %v892 = vpop.f32.mrb[0].mxu0
  %v893 = vadd.f32 %v844, %v892
  %v894 = vpop.f32.mrb[0].mxu0
  %v895 = vpop.f32.mrb[0].mxu0
  %v896 = vadd.f32 %v847, %v895
  %v897 = vpop.f32.mrb[0].mxu0
  %898 = vdwg.mxu0
  %v995 = vunpack.c.l.b16 %v60
  %v996 = vunpack.c.h.b16 %v60
  %v997 = vunpack.c.l.b16 %v61
  %v998 = vunpack.c.l.b16 %v62
  %v999 = vunpack.c.h.b16 %v62
  %v1000 = vunpack.c.l.b16 %v63
  %v1001 = vunpack.c.l.b16 %v64
  %v1002 = vunpack.c.h.b16 %v64
  %v1003 = vunpack.c.l.b16 %v65
  %v1004 = vunpack.c.l.b16 %v66
  %v1005 = vunpack.c.h.b16 %v66
  %v1006 = vunpack.c.l.b16 %v67
  %v1007 = vunpack.c.l.b16 %v68
  %v1008 = vunpack.c.h.b16 %v68
  %v1009 = vunpack.c.l.b16 %v69
  %v1010 = vunpack.c.l.b16 %v70
  %v1011 = vunpack.c.h.b16 %v70
  %v1012 = vunpack.c.l.b16 %v71
  %v1013 = vunpack.c.l.b16 %v72
  %v1014 = vunpack.c.h.b16 %v72
  %v1015 = vunpack.c.l.b16 %v73
  %v1016 = vunpack.c.l.b16 %v74
  %v1017 = vunpack.c.h.b16 %v74
  %v1018 = vunpack.c.l.b16 %v75
  %v1019 = vunpack.c.l.b16 %v76
  %v1020 = vunpack.c.h.b16 %v76
  %v1021 = vunpack.c.l.b16 %v77
  %v1022 = vunpack.c.l.b16 %v78
  %v1023 = vunpack.c.h.b16 %v78
  %v1024 = vunpack.c.l.b16 %v79
  %v1025 = vunpack.c.l.b16 %v80
  %v1026 = vunpack.c.h.b16 %v80
  %v1027 = vunpack.c.l.b16 %v81
  %v1028 = vunpack.c.l.b16 %v82
  %v1029 = vunpack.c.h.b16 %v82
  %v1030 = vunpack.c.l.b16 %v83
  %v1031 = vunpack.c.l.b16 %v84
  %v1032 = vunpack.c.h.b16 %v84
  %v1033 = vunpack.c.l.b16 %v85
  %v1034 = vunpack.c.l.b16 %v86
  %v1035 = vunpack.c.h.b16 %v86
  %v1036 = vunpack.c.l.b16 %v87
  %v1037 = vunpack.c.l.b16 %v88
  %v1038 = vunpack.c.h.b16 %v88
  %v1039 = vunpack.c.l.b16 %v89
  %v1040 = vunpack.c.l.b16 %v90
  %v1041 = vunpack.c.h.b16 %v90
  %v1042 = vunpack.c.l.b16 %v91
  %v1043 = vunpack.c.l.b16 %v92
  %v1044 = vunpack.c.h.b16 %v92
  %v1045 = vunpack.c.l.b16 %v93
  %v1046 = vunpack.c.l.b16 %v94
  %v1047 = vunpack.c.h.b16 %v94
  %v1048 = vunpack.c.l.b16 %v95
  %v1049 = vunpack.c.l.b16 %v96
  %v1050 = vunpack.c.h.b16 %v96
  %v1051 = vunpack.c.l.b16 %v97
  %v1052 = vunpack.c.l.b16 %v98
  %v1053 = vunpack.c.h.b16 %v98
  %v1054 = vunpack.c.l.b16 %v99
  %v1055 = vunpack.c.l.b16 %v100
  %v1056 = vunpack.c.h.b16 %v100
  %v1057 = vunpack.c.l.b16 %v101
  %v1058 = vunpack.c.l.b16 %v102
  %v1059 = vunpack.c.h.b16 %v102
  %v1060 = vunpack.c.l.b16 %v103
  %v1061 = vunpack.c.l.b16 %v104
  %v1062 = vunpack.c.h.b16 %v104
  %v1063 = vunpack.c.l.b16 %v105
  %v1064 = vunpack.c.l.b16 %v106
  %v1065 = vunpack.c.h.b16 %v106
  %v1066 = vunpack.c.l.b16 %v107
  %v1067 = vunpack.c.l.b16 %v108
  %v1068 = vunpack.c.h.b16 %v108
  %v1069 = vunpack.c.l.b16 %v109
  %v1070 = vunpack.c.l.b16 %v110
  %v1071 = vunpack.c.h.b16 %v110
  %v1072 = vunpack.c.l.b16 %v111
  %v1073 = vunpack.c.l.b16 %v112
  %v1074 = vunpack.c.h.b16 %v112
  %v1075 = vunpack.c.l.b16 %v113
  %v1076 = vunpack.c.l.b16 %v114
  %v1077 = vunpack.c.h.b16 %v114
  %v1078 = vunpack.c.l.b16 %v115
  %v1079 = vunpack.c.l.b16 %v116
  %v1080 = vunpack.c.h.b16 %v116
  %v1081 = vunpack.c.l.b16 %v117
  %v1082 = vunpack.c.l.b16 %v118
  %v1083 = vunpack.c.h.b16 %v118
  %v1084 = vunpack.c.l.b16 %v119
  %v1085 = vunpack.c.l.b16 %v120
  %v1086 = vunpack.c.h.b16 %v120
  %v1087 = vunpack.c.l.b16 %v121
  %v1088 = vunpack.c.l.b16 %v122
  %v1089 = vunpack.c.h.b16 %v122
  %v1090 = vunpack.c.l.b16 %v123
  %v1091 = vunpack.c.l.b16 %v124
  %v1092 = vunpack.c.h.b16 %v124
  %v1093 = vunpack.c.l.b16 %v125
  %v1094 = vunpack.c.l.b16 %v126
  %v1095 = vunpack.c.h.b16 %v126
  %v1096 = vunpack.c.l.b16 %v127
  %v1097 = vunpack.c.l.b16 %v128
  %v1098 = vunpack.c.h.b16 %v128
  %v1099 = vunpack.c.l.b16 %v129
  %v1100 = vunpack.c.l.b16 %v130
  %v1101 = vunpack.c.h.b16 %v130
  %v1102 = vunpack.c.l.b16 %v131
  %v1103 = vunpack.c.l.b16 %v132
  %v1104 = vunpack.c.h.b16 %v132
  %v1105 = vunpack.c.l.b16 %v133
  %v1106 = vunpack.c.l.b16 %v134
  %v1107 = vunpack.c.h.b16 %v134
  %v1108 = vunpack.c.l.b16 %v135
  %v1109 = vunpack.c.l.b16 %v136
  %v1110 = vunpack.c.h.b16 %v136
  %v1111 = vunpack.c.l.b16 %v137
  %v1112 = vunpack.c.l.b16 %v138
  %v1113 = vunpack.c.h.b16 %v138
  %v1114 = vunpack.c.l.b16 %v139
  %v1115 = vunpack.c.l.b16 %v140
  %v1116 = vunpack.c.h.b16 %v140
  %v1117 = vunpack.c.l.b16 %v141
  %v1118 = vunpack.c.l.b16 %v142
  %v1119 = vunpack.c.h.b16 %v142
  %v1120 = vunpack.c.l.b16 %v143
  %v1121 = vunpack.c.l.b16 %v144
  %v1122 = vunpack.c.h.b16 %v144
  %v1123 = vunpack.c.l.b16 %v145
  %v1124 = vunpack.c.l.b16 %v146
  %v1125 = vunpack.c.h.b16 %v146
  %v1126 = vunpack.c.l.b16 %v147
  %v1127 = vunpack.c.l.b16 %v148
  %v1128 = vunpack.c.h.b16 %v148
  %v1129 = vunpack.c.l.b16 %v149
  %v1130 = vunpack.c.l.b16 %v150
  %v1131 = vunpack.c.h.b16 %v150
  %v1132 = vunpack.c.l.b16 %v151
  %v1133 = vunpack.c.l.b16 %v152
  %v1134 = vunpack.c.h.b16 %v152
  %v1135 = vunpack.c.l.b16 %v153
  %v1136 = vunpack.c.l.b16 %v154
  %v1137 = vunpack.c.h.b16 %v154
  %v1138 = vunpack.c.l.b16 %v155
  %v1139 = vpack.c.b16 %v998, %v995
  %v1140 = vpack.c.b16 %v999, %v996
  %v1141 = vpack.c.b16 %v1000, %v997
  %v1142 = vpack.c.b16 %v1004, %v1001
  %v1143 = vpack.c.b16 %v1005, %v1002
  %v1144 = vpack.c.b16 %v1006, %v1003
  %v1145 = vpack.c.b16 %v1010, %v1007
  %v1146 = vpack.c.b16 %v1011, %v1008
  %v1147 = vpack.c.b16 %v1012, %v1009
  %v1148 = vpack.c.b16 %v1016, %v1013
  %v1149 = vpack.c.b16 %v1017, %v1014
  %v1150 = vpack.c.b16 %v1018, %v1015
  %v1151 = vpack.c.b16 %v1022, %v1019
  %v1152 = vpack.c.b16 %v1023, %v1020
  %v1153 = vpack.c.b16 %v1024, %v1021
  %v1154 = vpack.c.b16 %v1028, %v1025
  %v1155 = vpack.c.b16 %v1029, %v1026
  %v1156 = vpack.c.b16 %v1030, %v1027
  %v1157 = vpack.c.b16 %v1034, %v1031
  %v1158 = vpack.c.b16 %v1035, %v1032
  %v1159 = vpack.c.b16 %v1036, %v1033
  %v1160 = vpack.c.b16 %v1040, %v1037
  %v1161 = vpack.c.b16 %v1041, %v1038
  %v1162 = vpack.c.b16 %v1042, %v1039
  %v1163 = vpack.c.b16 %v1046, %v1043
  %v1164 = vpack.c.b16 %v1047, %v1044
  %v1165 = vpack.c.b16 %v1048, %v1045
  %v1166 = vpack.c.b16 %v1052, %v1049
  %v1167 = vpack.c.b16 %v1053, %v1050
  %v1168 = vpack.c.b16 %v1054, %v1051
  %v1169 = vpack.c.b16 %v1058, %v1055
  %v1170 = vpack.c.b16 %v1059, %v1056
  %v1171 = vpack.c.b16 %v1060, %v1057
  %v1172 = vpack.c.b16 %v1064, %v1061
  %v1173 = vpack.c.b16 %v1065, %v1062
  %v1174 = vpack.c.b16 %v1066, %v1063
  %v1175 = vpack.c.b16 %v1070, %v1067
  %v1176 = vpack.c.b16 %v1071, %v1068
  %v1177 = vpack.c.b16 %v1072, %v1069
  %v1178 = vpack.c.b16 %v1076, %v1073
  %v1179 = vpack.c.b16 %v1077, %v1074
  %v1180 = vpack.c.b16 %v1078, %v1075
  %v1181 = vpack.c.b16 %v1082, %v1079
  %v1182 = vpack.c.b16 %v1083, %v1080
  %v1183 = vpack.c.b16 %v1084, %v1081
  %v1184 = vpack.c.b16 %v1088, %v1085
  %v1185 = vpack.c.b16 %v1089, %v1086
  %v1186 = vpack.c.b16 %v1090, %v1087
  %v1187 = vpack.c.b16 %v1094, %v1091
  %v1188 = vpack.c.b16 %v1095, %v1092
  %v1189 = vpack.c.b16 %v1096, %v1093
  %v1190 = vpack.c.b16 %v1100, %v1097
  %v1191 = vpack.c.b16 %v1101, %v1098
  %v1192 = vpack.c.b16 %v1102, %v1099
  %v1193 = vpack.c.b16 %v1106, %v1103
  %v1194 = vpack.c.b16 %v1107, %v1104
  %v1195 = vpack.c.b16 %v1108, %v1105
  %v1196 = vpack.c.b16 %v1112, %v1109
  %v1197 = vpack.c.b16 %v1113, %v1110
  %v1198 = vpack.c.b16 %v1114, %v1111
  %v1199 = vpack.c.b16 %v1118, %v1115
  %v1200 = vpack.c.b16 %v1119, %v1116
  %v1201 = vpack.c.b16 %v1120, %v1117
  %v1202 = vpack.c.b16 %v1124, %v1121
  %v1203 = vpack.c.b16 %v1125, %v1122
  %v1204 = vpack.c.b16 %v1126, %v1123
  %v1205 = vpack.c.b16 %v1130, %v1127
  %v1206 = vpack.c.b16 %v1131, %v1128
  %v1207 = vpack.c.b16 %v1132, %v1129
  %v1208 = vpack.c.b16 %v1136, %v1133
  %v1209 = vpack.c.b16 %v1137, %v1134
  %v1210 = vpack.c.b16 %v1138, %v1135
  %1283 = vmatprep.subr.bf16.mxu0 %v1140
  %1284 = vmatpush1.bf16.msra.mxu0 %v1139
  %1285 = vmatprep.subr.bf16.mxu0 %v1143
  %1286 = vmatpush1.bf16.msra.mxu0 %v1142
  %1287 = vmatprep.subr.bf16.mxu0 %v1146
  %1288 = vmatpush1.bf16.msra.mxu0 %v1145
  %1289 = vmatprep.subr.bf16.mxu0 %v1149
  %1290 = vmatpush1.bf16.msra.mxu0 %v1148
  %1291 = vmatprep.subr.bf16.mxu0 %v1152
  %1292 = vmatpush1.bf16.msra.mxu0 %v1151
  %1293 = vmatprep.subr.bf16.mxu0 %v1155
  %1294 = vmatpush1.bf16.msra.mxu0 %v1154
  %1295 = vmatprep.subr.bf16.mxu0 %v1158
  %1296 = vmatpush1.bf16.msra.mxu0 %v1157
  %1297 = vmatprep.subr.bf16.mxu0 %v1161
  %1298 = vmatpush1.bf16.msra.mxu0 %v1160
  %1299 = vmatprep.subr.bf16.mxu0 %v1164
  %1300 = vmatpush1.bf16.msra.mxu0 %v1163
  %1301 = vmatprep.subr.bf16.mxu0 %v1167
  %1302 = vmatpush1.bf16.msra.mxu0 %v1166
  %1303 = vmatprep.subr.bf16.mxu0 %v1170
  %1304 = vmatpush1.bf16.msra.mxu0 %v1169
  %1305 = vmatprep.subr.bf16.mxu0 %v1173
  %1306 = vmatpush1.bf16.msra.mxu0 %v1172
  %1307 = vmatprep.subr.bf16.mxu0 %v1176
  %1308 = vmatpush1.bf16.msra.mxu0 %v1175
  %1309 = vmatprep.subr.bf16.mxu0 %v1179
  %1310 = vmatpush1.bf16.msra.mxu0 %v1178
  %1311 = vmatprep.subr.bf16.mxu0 %v1182
  %1312 = vmatpush1.bf16.msra.mxu0 %v1181
  %1313 = vmatprep.subr.bf16.mxu0 %v1185
  %1314 = vmatpush1.bf16.msra.mxu0 %v1184
  %1315 = vmatprep.mubr.bf16.mxu0 %v28
  %1316 = vmatmul.mubr.bf16.gmra.mrb[0].mxu0 %v27
  %v1317 = vpop.f32.mrb[0].mxu0
  %v1318 = vadd.f32 %v783, %v1317
  %v1319 = vpop.f32.mrb[0].mxu0
  %v1320 = vadd.f32 %v785, %v1319
  %v1321 = vpop.f32.mrb[0].mxu0
  %v1322 = vadd.f32 %v787, %v1321
  %v1323 = vpop.f32.mrb[0].mxu0
  %v1324 = vadd.f32 %v789, %v1323
  %1325 = vmatprep.mubr.bf16.mxu0 %v31
  %1326 = vmatmul.mubr.bf16.gmra.mrb[0].mxu0 %v30
  %v1327 = vpop.f32.mrb[0].mxu0
  %v1328 = vadd.f32 %v793, %v1327
  %v1329 = vpop.f32.mrb[0].mxu0
  %v1330 = vadd.f32 %v795, %v1329
  %v1331 = vpop.f32.mrb[0].mxu0
  %v1332 = vadd.f32 %v797, %v1331
  %v1333 = vpop.f32.mrb[0].mxu0
  %v1334 = vadd.f32 %v799, %v1333
  %1335 = vdwg.mxu0
  %1336 = vmatprep.subr.bf16.mxu0 %v1188
  %1337 = vmatpush1.bf16.msra.mxu0 %v1187
  %1338 = vmatprep.subr.bf16.mxu0 %v1191
  %1339 = vmatpush1.bf16.msra.mxu0 %v1190
  %1340 = vmatprep.subr.bf16.mxu0 %v1194
  %1341 = vmatpush1.bf16.msra.mxu0 %v1193
  %1342 = vmatprep.subr.bf16.mxu0 %v1197
  %1343 = vmatpush1.bf16.msra.mxu0 %v1196
  %1344 = vmatprep.subr.bf16.mxu0 %v1200
  %1345 = vmatpush1.bf16.msra.mxu0 %v1199
  %1346 = vmatprep.subr.bf16.mxu0 %v1203
  %1347 = vmatpush1.bf16.msra.mxu0 %v1202
  %1348 = vmatprep.subr.bf16.mxu0 %v1206
  %1349 = vmatpush1.bf16.msra.mxu0 %v1205
  %1350 = vmatprep.subr.bf16.mxu0 %v1209
  %1351 = vmatpush1.bf16.msra.mxu0 %v1208
  %1352 = vmatprep.subr.bf16.mxu0 0
  %1353 = vmatpush1.bf16.msra.mxu0 0
  %1354 = vmatprep.subr.bf16.mxu0 0
  %1355 = vmatpush1.bf16.msra.mxu0 0
  %1356 = vmatprep.subr.bf16.mxu0 0
  %1357 = vmatpush1.bf16.msra.mxu0 0
  %1358 = vmatprep.subr.bf16.mxu0 0
  %1359 = vmatpush1.bf16.msra.mxu0 0
  %1360 = vmatprep.subr.bf16.mxu0 0
  %1361 = vmatpush1.bf16.msra.mxu0 0
  %1362 = vmatprep.subr.bf16.mxu0 0
  %1363 = vmatpush1.bf16.msra.mxu0 0
  %1364 = vmatprep.subr.bf16.mxu0 0
  %1365 = vmatpush1.bf16.msra.mxu0 0
  %1366 = vmatprep.subr.bf16.mxu0 0
  %1367 = vmatpush1.bf16.msra.mxu0 0
  %1368 = vmatprep.mubr.bf16.mxu0 0
  %1369 = vmatmul.mubr.bf16.gmra.mrb[0].mxu0 %v29
  %v1370 = vpop.f32.mrb[0].mxu0
  %v1371 = vadd.f32 %v1318, %v1370
  %v1372 = vpop.f32.mrb[0].mxu0
  %v1373 = vadd.f32 %v1320, %v1372
  %v1374 = vpop.f32.mrb[0].mxu0
  %v1375 = vadd.f32 %v1322, %v1374
  %v1376 = vpop.f32.mrb[0].mxu0
  %v1377 = vadd.f32 %v1324, %v1376
  %1378 = vmatprep.mubr.bf16.mxu0 0
  %1379 = vmatmul.mubr.bf16.gmra.mrb[0].mxu0 %v32
  %v1380 = vpop.f32.mrb[0].mxu0
  %v1381 = vadd.f32 %v1328, %v1380
  %v1382 = vpop.f32.mrb[0].mxu0
  %v1383 = vadd.f32 %v1330, %v1382
  %v1384 = vpop.f32.mrb[0].mxu0
  %v1385 = vadd.f32 %v1332, %v1384
  %v1386 = vpop.f32.mrb[0].mxu0
  %v1387 = vadd.f32 %v1334, %v1386
  %1388 = vdwg.mxu0
  %1389 = vmatprep.subr.bf16.mxu0 0
  %1390 = vmatpush1.bf16.msra.mxu0 %v1141
  %1391 = vmatprep.subr.bf16.mxu0 0
  %1392 = vmatpush1.bf16.msra.mxu0 %v1144
  %1393 = vmatprep.subr.bf16.mxu0 0
  %1394 = vmatpush1.bf16.msra.mxu0 %v1147
  %1395 = vmatprep.subr.bf16.mxu0 0
  %1396 = vmatpush1.bf16.msra.mxu0 %v1150
  %1397 = vmatprep.subr.bf16.mxu0 0
  %1398 = vmatpush1.bf16.msra.mxu0 %v1153
  %1399 = vmatprep.subr.bf16.mxu0 0
  %1400 = vmatpush1.bf16.msra.mxu0 %v1156
  %1401 = vmatprep.subr.bf16.mxu0 0
  %1402 = vmatpush1.bf16.msra.mxu0 %v1159
  %1403 = vmatprep.subr.bf16.mxu0 0
  %1404 = vmatpush1.bf16.msra.mxu0 %v1162
  %1405 = vmatprep.subr.bf16.mxu0 0
  %1406 = vmatpush1.bf16.msra.mxu0 %v1165
  %1407 = vmatprep.subr.bf16.mxu0 0
  %1408 = vmatpush1.bf16.msra.mxu0 %v1168
  %1409 = vmatprep.subr.bf16.mxu0 0
  %1410 = vmatpush1.bf16.msra.mxu0 %v1171
  %1411 = vmatprep.subr.bf16.mxu0 0
  %1412 = vmatpush1.bf16.msra.mxu0 %v1174
  %1413 = vmatprep.subr.bf16.mxu0 0
  %1414 = vmatpush1.bf16.msra.mxu0 %v1177
  %1415 = vmatprep.subr.bf16.mxu0 0
  %1416 = vmatpush1.bf16.msra.mxu0 %v1180
  %1417 = vmatprep.subr.bf16.mxu0 0
  %1418 = vmatpush1.bf16.msra.mxu0 %v1183
  %1419 = vmatprep.subr.bf16.mxu0 0
  %1420 = vmatpush1.bf16.msra.mxu0 %v1186
  %1421 = vmatprep.mubr.bf16.mxu0 %v28
  %1422 = vmatmul.mubr.bf16.gmra.mrb[0].mxu0 %v27
  %v1423 = vpop.f32.mrb[0].mxu0
  %v1424 = vadd.f32 %v885, %v1423
  %v1425 = vpop.f32.mrb[0].mxu0
  %v1426 = vpop.f32.mrb[0].mxu0
  %v1427 = vadd.f32 %v888, %v1426
  %v1428 = vpop.f32.mrb[0].mxu0
  %1429 = vmatprep.mubr.bf16.mxu0 %v31
  %1430 = vmatmul.mubr.bf16.gmra.mrb[0].mxu0 %v30
  %v1431 = vpop.f32.mrb[0].mxu0
  %v1432 = vadd.f32 %v893, %v1431
  %v1433 = vpop.f32.mrb[0].mxu0
  %v1434 = vpop.f32.mrb[0].mxu0
  %v1435 = vadd.f32 %v896, %v1434
  %v1436 = vpop.f32.mrb[0].mxu0
  %1437 = vdwg.mxu0
  %1438 = vmatprep.subr.bf16.mxu0 0
  %1439 = vmatpush1.bf16.msra.mxu0 %v1189
  %1440 = vmatprep.subr.bf16.mxu0 0
  %1441 = vmatpush1.bf16.msra.mxu0 %v1192
  %1442 = vmatprep.subr.bf16.mxu0 0
  %1443 = vmatpush1.bf16.msra.mxu0 %v1195
  %1444 = vmatprep.subr.bf16.mxu0 0
  %1445 = vmatpush1.bf16.msra.mxu0 %v1198
  %1446 = vmatprep.subr.bf16.mxu0 0
  %1447 = vmatpush1.bf16.msra.mxu0 %v1201
  %1448 = vmatprep.subr.bf16.mxu0 0
  %1449 = vmatpush1.bf16.msra.mxu0 %v1204
  %1450 = vmatprep.subr.bf16.mxu0 0
  %1451 = vmatpush1.bf16.msra.mxu0 %v1207
  %1452 = vmatprep.subr.bf16.mxu0 0
  %1453 = vmatpush1.bf16.msra.mxu0 %v1210
  %1454 = vmatprep.subr.bf16.mxu0 0
  %1455 = vmatpush1.bf16.msra.mxu0 0
  %1456 = vmatprep.subr.bf16.mxu0 0
  %1457 = vmatpush1.bf16.msra.mxu0 0
  %1458 = vmatprep.subr.bf16.mxu0 0
  %1459 = vmatpush1.bf16.msra.mxu0 0
  %1460 = vmatprep.subr.bf16.mxu0 0
  %1461 = vmatpush1.bf16.msra.mxu0 0
  %1462 = vmatprep.subr.bf16.mxu0 0
  %1463 = vmatpush1.bf16.msra.mxu0 0
  %1464 = vmatprep.subr.bf16.mxu0 0
  %1465 = vmatpush1.bf16.msra.mxu0 0
  %1466 = vmatprep.subr.bf16.mxu0 0
  %1467 = vmatpush1.bf16.msra.mxu0 0
  %1468 = vmatprep.subr.bf16.mxu0 0
  %1469 = vmatpush1.bf16.msra.mxu0 0
  %1470 = vmatprep.mubr.bf16.mxu0 0
  %1471 = vmatmul.mubr.bf16.gmra.mrb[0].mxu0 %v29
  %v1472 = vpop.f32.mrb[0].mxu0
  %v1473 = vadd.f32 %v1424, %v1472
  %v1474 = vpop.f32.mrb[0].mxu0
  %v1475 = vpop.f32.mrb[0].mxu0
  %v1476 = vadd.f32 %v1427, %v1475
  %v1477 = vpop.f32.mrb[0].mxu0
  %1478 = vmatprep.mubr.bf16.mxu0 0
  %1479 = vmatmul.mubr.bf16.gmra.mrb[0].mxu0 %v32
  %v1480 = vpop.f32.mrb[0].mxu0
  %v1481 = vadd.f32 %v1432, %v1480
  %v1482 = vpop.f32.mrb[0].mxu0
  %v1483 = vpop.f32.mrb[0].mxu0
  %v1484 = vadd.f32 %v1435, %v1483
  %v1485 = vpop.f32.mrb[0].mxu0
  %1486 = vdwg.mxu0
  %s1487 = scalar_lea.vmem %s1, 1152
  %v1488 = vld [vmem:[%s1487] sm:$0xff]
  %v1489 = vld [vmem:[%s1487 + $0x8] sm:$0xf]
  %v1490 = vld [vmem:[%s1487 + $0xc] sm:$0xff]
  %v1491 = vld [vmem:[%s1487 + $0x14] sm:$0xf]
  %v1492 = vld [vmem:[%s1487 + $0x18] sm:$0xff]
  %v1493 = vld [vmem:[%s1487 + $0x20] sm:$0xf]
  %v1494 = vld [vmem:[%s1487 + $0x24] sm:$0xff]
  %v1495 = vld [vmem:[%s1487 + $0x2c] sm:$0xf]
  %v1496 = vld [vmem:[%s1487 + $0x30] sm:$0xff]
  %v1497 = vld [vmem:[%s1487 + $0x38] sm:$0xf]
  %v1498 = vld [vmem:[%s1487 + $0x3c] sm:$0xff]
  %v1499 = vld [vmem:[%s1487 + $0x44] sm:$0xf]
  %v1500 = vld [vmem:[%s1487 + $0x48] sm:$0xff]
  %v1501 = vld [vmem:[%s1487 + $0x50] sm:$0xf]
  %v1502 = vld [vmem:[%s1487 + $0x54] sm:$0xff]
  %v1503 = vld [vmem:[%s1487 + $0x5c] sm:$0xf]
  %v1504 = vld [vmem:[%s1487 + $0x60] sm:$0xff]
  %v1505 = vld [vmem:[%s1487 + $0x68] sm:$0xf]
  %v1506 = vld [vmem:[%s1487 + $0x6c] sm:$0xff]
  %v1507 = vld [vmem:[%s1487 + $0x74] sm:$0xf]
  %v1508 = vld [vmem:[%s1487 + $0x78] sm:$0xff]
  %v1509 = vld [vmem:[%s1487 + $0x80] sm:$0xf]
  %v1510 = vld [vmem:[%s1487 + $0x84] sm:$0xff]
  %v1511 = vld [vmem:[%s1487 + $0x8c] sm:$0xf]
  %v1512 = vld [vmem:[%s1487 + $0x90] sm:$0xff]
  %v1513 = vld [vmem:[%s1487 + $0x98] sm:$0xf]
  %v1514 = vld [vmem:[%s1487 + $0x9c] sm:$0xff]
  %v1515 = vld [vmem:[%s1487 + $0xa4] sm:$0xf]
  %v1516 = vld [vmem:[%s1487 + $0xa8] sm:$0xff]
  %v1517 = vld [vmem:[%s1487 + $0xb0] sm:$0xf]
  %v1518 = vld [vmem:[%s1487 + $0xb4] sm:$0xff]
  %v1519 = vld [vmem:[%s1487 + $0xbc] sm:$0xf]
  %v1520 = vld [vmem:[%s1487 + $0xc0] sm:$0xff]
  %v1521 = vld [vmem:[%s1487 + $0xc8] sm:$0xf]
  %v1522 = vld [vmem:[%s1487 + $0xcc] sm:$0xff]
  %v1523 = vld [vmem:[%s1487 + $0xd4] sm:$0xf]
  %v1524 = vld [vmem:[%s1487 + $0xd8] sm:$0xff]
  %v1525 = vld [vmem:[%s1487 + $0xe0] sm:$0xf]
  %v1526 = vld [vmem:[%s1487 + $0xe4] sm:$0xff]
  %v1527 = vld [vmem:[%s1487 + $0xec] sm:$0xf]
  %v1528 = vld [vmem:[%s1487 + $0xf0] sm:$0xff]
  %v1529 = vld [vmem:[%s1487 + $0xf8] sm:$0xf]
  %v1530 = vld [vmem:[%s1487 + $0xfc] sm:$0xff]
  %v1531 = vld [vmem:[%s1487 + $0x104] sm:$0xf]
  %v1532 = vld [vmem:[%s1487 + $0x108] sm:$0xff]
  %v1533 = vld [vmem:[%s1487 + $0x110] sm:$0xf]
  %v1534 = vld [vmem:[%s1487 + $0x114] sm:$0xff]
  %v1535 = vld [vmem:[%s1487 + $0x11c] sm:$0xf]
  %v1536 = vld [vmem:[%s1487 + $0x120] sm:$0xff]
  %v1537 = vld [vmem:[%s1487 + $0x128] sm:$0xf]
  %v1538 = vld [vmem:[%s1487 + $0x12c] sm:$0xff]
  %v1539 = vld [vmem:[%s1487 + $0x134] sm:$0xf]
  %v1540 = vld [vmem:[%s1487 + $0x138] sm:$0xff]
  %v1541 = vld [vmem:[%s1487 + $0x140] sm:$0xf]
  %v1542 = vld [vmem:[%s1487 + $0x144] sm:$0xff]
  %v1543 = vld [vmem:[%s1487 + $0x14c] sm:$0xf]
  %v1544 = vld [vmem:[%s1487 + $0x150] sm:$0xff]
  %v1545 = vld [vmem:[%s1487 + $0x158] sm:$0xf]
  %v1546 = vld [vmem:[%s1487 + $0x15c] sm:$0xff]
  %v1547 = vld [vmem:[%s1487 + $0x164] sm:$0xf]
  %v1548 = vld [vmem:[%s1487 + $0x168] sm:$0xff]
  %v1549 = vld [vmem:[%s1487 + $0x170] sm:$0xf]
  %v1550 = vld [vmem:[%s1487 + $0x174] sm:$0xff]
  %v1551 = vld [vmem:[%s1487 + $0x17c] sm:$0xf]
  %v1552 = vld [vmem:[%s1487 + $0x180] sm:$0xff]
  %v1553 = vld [vmem:[%s1487 + $0x188] sm:$0xf]
  %v1554 = vld [vmem:[%s1487 + $0x18c] sm:$0xff]
  %v1555 = vld [vmem:[%s1487 + $0x194] sm:$0xf]
  %v1556 = vld [vmem:[%s1487 + $0x198] sm:$0xff]
  %v1557 = vld [vmem:[%s1487 + $0x1a0] sm:$0xf]
  %v1558 = vld [vmem:[%s1487 + $0x1a4] sm:$0xff]
  %v1559 = vld [vmem:[%s1487 + $0x1ac] sm:$0xf]
  %v1560 = vld [vmem:[%s1487 + $0x1b0] sm:$0xff]
  %v1561 = vld [vmem:[%s1487 + $0x1b8] sm:$0xf]
  %v1562 = vld [vmem:[%s1487 + $0x1bc] sm:$0xff]
  %v1563 = vld [vmem:[%s1487 + $0x1c4] sm:$0xf]
  %v1564 = vld [vmem:[%s1487 + $0x1c8] sm:$0xff]
  %v1565 = vld [vmem:[%s1487 + $0x1d0] sm:$0xf]
  %v1566 = vld [vmem:[%s1487 + $0x1d4] sm:$0xff]
  %v1567 = vld [vmem:[%s1487 + $0x1dc] sm:$0xf]
  %v1568 = vld [vmem:[%s1487 + $0x1e0] sm:$0xff]
  %v1569 = vld [vmem:[%s1487 + $0x1e8] sm:$0xf]
  %v1570 = vld [vmem:[%s1487 + $0x1ec] sm:$0xff]
  %v1571 = vld [vmem:[%s1487 + $0x1f4] sm:$0xf]
  %v1572 = vld [vmem:[%s1487 + $0x1f8] sm:$0xff]
  %v1573 = vld [vmem:[%s1487 + $0x200] sm:$0xf]
  %v1574 = vld [vmem:[%s1487 + $0x204] sm:$0xff]
  %v1575 = vld [vmem:[%s1487 + $0x20c] sm:$0xf]
  %v1576 = vld [vmem:[%s1487 + $0x210] sm:$0xff]
  %v1577 = vld [vmem:[%s1487 + $0x218] sm:$0xf]
  %v1578 = vld [vmem:[%s1487 + $0x21c] sm:$0xff]
  %v1579 = vld [vmem:[%s1487 + $0x224] sm:$0xf]
  %v1580 = vld [vmem:[%s1487 + $0x228] sm:$0xff]
  %v1581 = vld [vmem:[%s1487 + $0x230] sm:$0xf]
  %v1582 = vld [vmem:[%s1487 + $0x234] sm:$0xff]
  %v1583 = vld [vmem:[%s1487 + $0x23c] sm:$0xf]
  %vm1590 = vcmask 1046528
  %v1591 = vrot.slane %v54, 1
  %v1592 = vrot.slane %v57, 1
  %v1593 = vsel %vm1590, %v1591, %v1592
  %v1594 = vrot.slane %v55, 1
  %v1595 = vrot.slane %v58, 1
  %v1596 = vsel %vm1590, %v1594, %v1595
  %v1597 = vrot.slane %v56, 1
  %v1598 = vrot.slane %v59, 1
  %v1599 = vsel %vm1590, %v1597, %v1598
  %v1702 = vunpack.c.l.b16 %v1488
  %v1703 = vunpack.c.h.b16 %v1488
  %v1704 = vunpack.c.l.b16 %v1489
  %v1705 = vunpack.c.l.b16 %v1490
  %v1706 = vunpack.c.h.b16 %v1490
  %v1707 = vunpack.c.l.b16 %v1491
  %v1708 = vunpack.c.l.b16 %v1492
  %v1709 = vunpack.c.h.b16 %v1492
  %v1710 = vunpack.c.l.b16 %v1493
  %v1711 = vunpack.c.l.b16 %v1494
  %v1712 = vunpack.c.h.b16 %v1494
  %v1713 = vunpack.c.l.b16 %v1495
  %v1714 = vunpack.c.l.b16 %v1496
  %v1715 = vunpack.c.h.b16 %v1496
  %v1716 = vunpack.c.l.b16 %v1497
  %v1717 = vunpack.c.l.b16 %v1498
  %v1718 = vunpack.c.h.b16 %v1498
  %v1719 = vunpack.c.l.b16 %v1499
  %v1720 = vunpack.c.l.b16 %v1500
  %v1721 = vunpack.c.h.b16 %v1500
  %v1722 = vunpack.c.l.b16 %v1501
  %v1723 = vunpack.c.l.b16 %v1502
  %v1724 = vunpack.c.h.b16 %v1502
  %v1725 = vunpack.c.l.b16 %v1503
  %v1726 = vunpack.c.l.b16 %v1504
  %v1727 = vunpack.c.h.b16 %v1504
  %v1728 = vunpack.c.l.b16 %v1505
  %v1729 = vunpack.c.l.b16 %v1506
  %v1730 = vunpack.c.h.b16 %v1506
  %v1731 = vunpack.c.l.b16 %v1507
  %v1732 = vunpack.c.l.b16 %v1508
  %v1733 = vunpack.c.h.b16 %v1508
  %v1734 = vunpack.c.l.b16 %v1509
  %v1735 = vunpack.c.l.b16 %v1510
  %v1736 = vunpack.c.h.b16 %v1510
  %v1737 = vunpack.c.l.b16 %v1511
  %v1738 = vunpack.c.l.b16 %v1512
  %v1739 = vunpack.c.h.b16 %v1512
  %v1740 = vunpack.c.l.b16 %v1513
  %v1741 = vunpack.c.l.b16 %v1514
  %v1742 = vunpack.c.h.b16 %v1514
  %v1743 = vunpack.c.l.b16 %v1515
  %v1744 = vunpack.c.l.b16 %v1516
  %v1745 = vunpack.c.h.b16 %v1516
  %v1746 = vunpack.c.l.b16 %v1517
  %v1747 = vunpack.c.l.b16 %v1518
  %v1748 = vunpack.c.h.b16 %v1518
  %v1749 = vunpack.c.l.b16 %v1519
  %v1750 = vunpack.c.l.b16 %v1520
  %v1751 = vunpack.c.h.b16 %v1520
  %v1752 = vunpack.c.l.b16 %v1521
  %v1753 = vunpack.c.l.b16 %v1522
  %v1754 = vunpack.c.h.b16 %v1522
  %v1755 = vunpack.c.l.b16 %v1523
  %v1756 = vunpack.c.l.b16 %v1524
  %v1757 = vunpack.c.h.b16 %v1524
  %v1758 = vunpack.c.l.b16 %v1525
  %v1759 = vunpack.c.l.b16 %v1526
  %v1760 = vunpack.c.h.b16 %v1526
  %v1761 = vunpack.c.l.b16 %v1527
  %v1762 = vunpack.c.l.b16 %v1528
  %v1763 = vunpack.c.h.b16 %v1528
  %v1764 = vunpack.c.l.b16 %v1529
  %v1765 = vunpack.c.l.b16 %v1530
  %v1766 = vunpack.c.h.b16 %v1530
  %v1767 = vunpack.c.l.b16 %v1531
  %v1768 = vunpack.c.l.b16 %v1532
  %v1769 = vunpack.c.h.b16 %v1532
  %v1770 = vunpack.c.l.b16 %v1533
  %v1771 = vunpack.c.l.b16 %v1534
  %v1772 = vunpack.c.h.b16 %v1534
  %v1773 = vunpack.c.l.b16 %v1535
  %v1774 = vunpack.c.l.b16 %v1536
  %v1775 = vunpack.c.h.b16 %v1536
  %v1776 = vunpack.c.l.b16 %v1537
  %v1777 = vunpack.c.l.b16 %v1538
  %v1778 = vunpack.c.h.b16 %v1538
  %v1779 = vunpack.c.l.b16 %v1539
  %v1780 = vunpack.c.l.b16 %v1540
  %v1781 = vunpack.c.h.b16 %v1540
  %v1782 = vunpack.c.l.b16 %v1541
  %v1783 = vunpack.c.l.b16 %v1542
  %v1784 = vunpack.c.h.b16 %v1542
  %v1785 = vunpack.c.l.b16 %v1543
  %v1786 = vunpack.c.l.b16 %v1544
  %v1787 = vunpack.c.h.b16 %v1544
  %v1788 = vunpack.c.l.b16 %v1545
  %v1789 = vunpack.c.l.b16 %v1546
  %v1790 = vunpack.c.h.b16 %v1546
  %v1791 = vunpack.c.l.b16 %v1547
  %v1792 = vunpack.c.l.b16 %v1548
  %v1793 = vunpack.c.h.b16 %v1548
  %v1794 = vunpack.c.l.b16 %v1549
  %v1795 = vunpack.c.l.b16 %v1550
  %v1796 = vunpack.c.h.b16 %v1550
  %v1797 = vunpack.c.l.b16 %v1551
  %v1798 = vunpack.c.l.b16 %v1552
  %v1799 = vunpack.c.h.b16 %v1552
  %v1800 = vunpack.c.l.b16 %v1553
  %v1801 = vunpack.c.l.b16 %v1554
  %v1802 = vunpack.c.h.b16 %v1554
  %v1803 = vunpack.c.l.b16 %v1555
  %v1804 = vunpack.c.l.b16 %v1556
  %v1805 = vunpack.c.h.b16 %v1556
  %v1806 = vunpack.c.l.b16 %v1557
  %v1807 = vunpack.c.l.b16 %v1558
  %v1808 = vunpack.c.h.b16 %v1558
  %v1809 = vunpack.c.l.b16 %v1559
  %v1810 = vunpack.c.l.b16 %v1560
  %v1811 = vunpack.c.h.b16 %v1560
  %v1812 = vunpack.c.l.b16 %v1561
  %v1813 = vunpack.c.l.b16 %v1562
  %v1814 = vunpack.c.h.b16 %v1562
  %v1815 = vunpack.c.l.b16 %v1563
  %v1816 = vunpack.c.l.b16 %v1564
  %v1817 = vunpack.c.h.b16 %v1564
  %v1818 = vunpack.c.l.b16 %v1565
  %v1819 = vunpack.c.l.b16 %v1566
  %v1820 = vunpack.c.h.b16 %v1566
  %v1821 = vunpack.c.l.b16 %v1567
  %v1822 = vunpack.c.l.b16 %v1568
  %v1823 = vunpack.c.h.b16 %v1568
  %v1824 = vunpack.c.l.b16 %v1569
  %v1825 = vunpack.c.l.b16 %v1570
  %v1826 = vunpack.c.h.b16 %v1570
  %v1827 = vunpack.c.l.b16 %v1571
  %v1828 = vunpack.c.l.b16 %v1572
  %v1829 = vunpack.c.h.b16 %v1572
  %v1830 = vunpack.c.l.b16 %v1573
  %v1831 = vunpack.c.l.b16 %v1574
  %v1832 = vunpack.c.h.b16 %v1574
  %v1833 = vunpack.c.l.b16 %v1575
  %v1834 = vunpack.c.l.b16 %v1576
  %v1835 = vunpack.c.h.b16 %v1576
  %v1836 = vunpack.c.l.b16 %v1577
  %v1837 = vunpack.c.l.b16 %v1578
  %v1838 = vunpack.c.h.b16 %v1578
  %v1839 = vunpack.c.l.b16 %v1579
  %v1840 = vunpack.c.l.b16 %v1580
  %v1841 = vunpack.c.h.b16 %v1580
  %v1842 = vunpack.c.l.b16 %v1581
  %v1843 = vunpack.c.l.b16 %v1582
  %v1844 = vunpack.c.h.b16 %v1582
  %v1845 = vunpack.c.l.b16 %v1583
  %v1846 = vpack.c.b16 %v1705, %v1702
  %v1847 = vpack.c.b16 %v1706, %v1703
  %v1848 = vpack.c.b16 %v1707, %v1704
  %v1849 = vpack.c.b16 %v1711, %v1708
  %v1850 = vpack.c.b16 %v1712, %v1709
  %v1851 = vpack.c.b16 %v1713, %v1710
  %v1852 = vpack.c.b16 %v1717, %v1714
  %v1853 = vpack.c.b16 %v1718, %v1715
  %v1854 = vpack.c.b16 %v1719, %v1716
  %v1855 = vpack.c.b16 %v1723, %v1720
  %v1856 = vpack.c.b16 %v1724, %v1721
  %v1857 = vpack.c.b16 %v1725, %v1722
  %v1858 = vpack.c.b16 %v1729, %v1726
  %v1859 = vpack.c.b16 %v1730, %v1727
  %v1860 = vpack.c.b16 %v1731, %v1728
  %v1861 = vpack.c.b16 %v1735, %v1732
  %v1862 = vpack.c.b16 %v1736, %v1733
  %v1863 = vpack.c.b16 %v1737, %v1734
  %v1864 = vpack.c.b16 %v1741, %v1738
  %v1865 = vpack.c.b16 %v1742, %v1739
  %v1866 = vpack.c.b16 %v1743, %v1740
  %v1867 = vpack.c.b16 %v1747, %v1744
  %v1868 = vpack.c.b16 %v1748, %v1745
  %v1869 = vpack.c.b16 %v1749, %v1746
  %v1870 = vpack.c.b16 %v1753, %v1750
  %v1871 = vpack.c.b16 %v1754, %v1751
  %v1872 = vpack.c.b16 %v1755, %v1752
  %v1873 = vpack.c.b16 %v1759, %v1756
  %v1874 = vpack.c.b16 %v1760, %v1757
  %v1875 = vpack.c.b16 %v1761, %v1758
  %v1876 = vpack.c.b16 %v1765, %v1762
  %v1877 = vpack.c.b16 %v1766, %v1763
  %v1878 = vpack.c.b16 %v1767, %v1764
  %v1879 = vpack.c.b16 %v1771, %v1768
  %v1880 = vpack.c.b16 %v1772, %v1769
  %v1881 = vpack.c.b16 %v1773, %v1770
  %v1882 = vpack.c.b16 %v1777, %v1774
  %v1883 = vpack.c.b16 %v1778, %v1775
  %v1884 = vpack.c.b16 %v1779, %v1776
  %v1885 = vpack.c.b16 %v1783, %v1780
  %v1886 = vpack.c.b16 %v1784, %v1781
  %v1887 = vpack.c.b16 %v1785, %v1782
  %v1888 = vpack.c.b16 %v1789, %v1786
  %v1889 = vpack.c.b16 %v1790, %v1787
  %v1890 = vpack.c.b16 %v1791, %v1788
  %v1891 = vpack.c.b16 %v1795, %v1792
  %v1892 = vpack.c.b16 %v1796, %v1793
  %v1893 = vpack.c.b16 %v1797, %v1794
  %v1894 = vpack.c.b16 %v1801, %v1798
  %v1895 = vpack.c.b16 %v1802, %v1799
  %v1896 = vpack.c.b16 %v1803, %v1800
  %v1897 = vpack.c.b16 %v1807, %v1804
  %v1898 = vpack.c.b16 %v1808, %v1805
  %v1899 = vpack.c.b16 %v1809, %v1806
  %v1900 = vpack.c.b16 %v1813, %v1810
  %v1901 = vpack.c.b16 %v1814, %v1811
  %v1902 = vpack.c.b16 %v1815, %v1812
  %v1903 = vpack.c.b16 %v1819, %v1816
  %v1904 = vpack.c.b16 %v1820, %v1817
  %v1905 = vpack.c.b16 %v1821, %v1818
  %v1906 = vpack.c.b16 %v1825, %v1822
  %v1907 = vpack.c.b16 %v1826, %v1823
  %v1908 = vpack.c.b16 %v1827, %v1824
  %v1909 = vpack.c.b16 %v1831, %v1828
  %v1910 = vpack.c.b16 %v1832, %v1829
  %v1911 = vpack.c.b16 %v1833, %v1830
  %v1912 = vpack.c.b16 %v1837, %v1834
  %v1913 = vpack.c.b16 %v1838, %v1835
  %v1914 = vpack.c.b16 %v1839, %v1836
  %v1915 = vpack.c.b16 %v1843, %v1840
  %v1916 = vpack.c.b16 %v1844, %v1841
  %v1917 = vpack.c.b16 %v1845, %v1842
  %1990 = vmatprep.subr.bf16.mxu0 %v1847
  %1991 = vmatpush1.bf16.msra.mxu0 %v1846
  %1992 = vmatprep.subr.bf16.mxu0 %v1850
  %1993 = vmatpush1.bf16.msra.mxu0 %v1849
  %1994 = vmatprep.subr.bf16.mxu0 %v1853
  %1995 = vmatpush1.bf16.msra.mxu0 %v1852
  %1996 = vmatprep.subr.bf16.mxu0 %v1856
  %1997 = vmatpush1.bf16.msra.mxu0 %v1855
  %1998 = vmatprep.subr.bf16.mxu0 %v1859
  %1999 = vmatpush1.bf16.msra.mxu0 %v1858
  %2000 = vmatprep.subr.bf16.mxu0 %v1862
  %2001 = vmatpush1.bf16.msra.mxu0 %v1861
  %2002 = vmatprep.subr.bf16.mxu0 %v1865
  %2003 = vmatpush1.bf16.msra.mxu0 %v1864
  %2004 = vmatprep.subr.bf16.mxu0 %v1868
  %2005 = vmatpush1.bf16.msra.mxu0 %v1867
  %2006 = vmatprep.subr.bf16.mxu0 %v1871
  %2007 = vmatpush1.bf16.msra.mxu0 %v1870
  %2008 = vmatprep.subr.bf16.mxu0 %v1874
  %2009 = vmatpush1.bf16.msra.mxu0 %v1873
  %2010 = vmatprep.subr.bf16.mxu0 %v1877
  %2011 = vmatpush1.bf16.msra.mxu0 %v1876
  %2012 = vmatprep.subr.bf16.mxu0 %v1880
  %2013 = vmatpush1.bf16.msra.mxu0 %v1879
  %2014 = vmatprep.subr.bf16.mxu0 %v1883
  %2015 = vmatpush1.bf16.msra.mxu0 %v1882
  %2016 = vmatprep.subr.bf16.mxu0 %v1886
  %2017 = vmatpush1.bf16.msra.mxu0 %v1885
  %2018 = vmatprep.subr.bf16.mxu0 %v1889
  %2019 = vmatpush1.bf16.msra.mxu0 %v1888
  %2020 = vmatprep.subr.bf16.mxu0 %v1892
  %2021 = vmatpush1.bf16.msra.mxu0 %v1891
  %2022 = vmatprep.mubr.bf16.mxu0 %v1596
  %2023 = vmatmul.mubr.bf16.gmra.mrb[0].mxu0 %v1593
  %v2024 = vpop.f32.mrb[0].mxu0
  %v2025 = vadd.f32 0.0, %v2024
  %v2026 = vpop.f32.mrb[0].mxu0
  %v2027 = vadd.f32 0.0, %v2026
  %v2028 = vpop.f32.mrb[0].mxu0
  %v2029 = vadd.f32 0.0, %v2028
  %v2030 = vpop.f32.mrb[0].mxu0
  %v2031 = vadd.f32 0.0, %v2030
  %2032 = vmatprep.mubr.bf16.mxu0 %v1595
  %2033 = vmatmul.mubr.bf16.gmra.mrb[0].mxu0 %v1592
  %v2034 = vpop.f32.mrb[0].mxu0
  %v2035 = vadd.f32 0.0, %v2034
  %v2036 = vpop.f32.mrb[0].mxu0
  %v2037 = vadd.f32 0.0, %v2036
  %v2038 = vpop.f32.mrb[0].mxu0
  %v2039 = vadd.f32 0.0, %v2038
  %v2040 = vpop.f32.mrb[0].mxu0
  %v2041 = vadd.f32 0.0, %v2040
  %2042 = vdwg.mxu0
  %2043 = vmatprep.subr.bf16.mxu0 %v1895
  %2044 = vmatpush1.bf16.msra.mxu0 %v1894
  %2045 = vmatprep.subr.bf16.mxu0 %v1898
  %2046 = vmatpush1.bf16.msra.mxu0 %v1897
  %2047 = vmatprep.subr.bf16.mxu0 %v1901
  %2048 = vmatpush1.bf16.msra.mxu0 %v1900
  %2049 = vmatprep.subr.bf16.mxu0 %v1904
  %2050 = vmatpush1.bf16.msra.mxu0 %v1903
  %2051 = vmatprep.subr.bf16.mxu0 %v1907
  %2052 = vmatpush1.bf16.msra.mxu0 %v1906
  %2053 = vmatprep.subr.bf16.mxu0 %v1910
  %2054 = vmatpush1.bf16.msra.mxu0 %v1909
  %2055 = vmatprep.subr.bf16.mxu0 %v1913
  %2056 = vmatpush1.bf16.msra.mxu0 %v1912
  %2057 = vmatprep.subr.bf16.mxu0 %v1916
  %2058 = vmatpush1.bf16.msra.mxu0 %v1915
  %2059 = vmatprep.subr.bf16.mxu0 0
  %2060 = vmatpush1.bf16.msra.mxu0 0
  %2061 = vmatprep.subr.bf16.mxu0 0
  %2062 = vmatpush1.bf16.msra.mxu0 0
  %2063 = vmatprep.subr.bf16.mxu0 0
  %2064 = vmatpush1.bf16.msra.mxu0 0
  %2065 = vmatprep.subr.bf16.mxu0 0
  %2066 = vmatpush1.bf16.msra.mxu0 0
  %2067 = vmatprep.subr.bf16.mxu0 0
  %2068 = vmatpush1.bf16.msra.mxu0 0
  %2069 = vmatprep.subr.bf16.mxu0 0
  %2070 = vmatpush1.bf16.msra.mxu0 0
  %2071 = vmatprep.subr.bf16.mxu0 0
  %2072 = vmatpush1.bf16.msra.mxu0 0
  %2073 = vmatprep.subr.bf16.mxu0 0
  %2074 = vmatpush1.bf16.msra.mxu0 0
  %2075 = vmatprep.mubr.bf16.mxu0 0
  %2076 = vmatmul.mubr.bf16.gmra.mrb[0].mxu0 %v1599
  %v2077 = vpop.f32.mrb[0].mxu0
  %v2078 = vadd.f32 %v2025, %v2077
  %v2079 = vpop.f32.mrb[0].mxu0
  %v2080 = vadd.f32 %v2027, %v2079
  %v2081 = vpop.f32.mrb[0].mxu0
  %v2082 = vadd.f32 %v2029, %v2081
  %v2083 = vpop.f32.mrb[0].mxu0
  %v2084 = vadd.f32 %v2031, %v2083
  %2085 = vmatprep.mubr.bf16.mxu0 0
  %2086 = vmatmul.mubr.bf16.gmra.mrb[0].mxu0 %v1598
  %v2087 = vpop.f32.mrb[0].mxu0
  %v2088 = vadd.f32 %v2035, %v2087
  %v2089 = vpop.f32.mrb[0].mxu0
  %v2090 = vadd.f32 %v2037, %v2089
  %v2091 = vpop.f32.mrb[0].mxu0
  %v2092 = vadd.f32 %v2039, %v2091
  %v2093 = vpop.f32.mrb[0].mxu0
  %v2094 = vadd.f32 %v2041, %v2093
  %2095 = vdwg.mxu0
  %2096 = vmatprep.subr.bf16.mxu0 0
  %2097 = vmatpush1.bf16.msra.mxu0 %v1848
  %2098 = vmatprep.subr.bf16.mxu0 0
  %2099 = vmatpush1.bf16.msra.mxu0 %v1851
  %2100 = vmatprep.subr.bf16.mxu0 0
  %2101 = vmatpush1.bf16.msra.mxu0 %v1854
  %2102 = vmatprep.subr.bf16.mxu0 0
  %2103 = vmatpush1.bf16.msra.mxu0 %v1857
  %2104 = vmatprep.subr.bf16.mxu0 0
  %2105 = vmatpush1.bf16.msra.mxu0 %v1860
  %2106 = vmatprep.subr.bf16.mxu0 0
  %2107 = vmatpush1.bf16.msra.mxu0 %v1863
  %2108 = vmatprep.subr.bf16.mxu0 0
  %2109 = vmatpush1.bf16.msra.mxu0 %v1866
  %2110 = vmatprep.subr.bf16.mxu0 0
  %2111 = vmatpush1.bf16.msra.mxu0 %v1869
  %2112 = vmatprep.subr.bf16.mxu0 0
  %2113 = vmatpush1.bf16.msra.mxu0 %v1872
  %2114 = vmatprep.subr.bf16.mxu0 0
  %2115 = vmatpush1.bf16.msra.mxu0 %v1875
  %2116 = vmatprep.subr.bf16.mxu0 0
  %2117 = vmatpush1.bf16.msra.mxu0 %v1878
  %2118 = vmatprep.subr.bf16.mxu0 0
  %2119 = vmatpush1.bf16.msra.mxu0 %v1881
  %2120 = vmatprep.subr.bf16.mxu0 0
  %2121 = vmatpush1.bf16.msra.mxu0 %v1884
  %2122 = vmatprep.subr.bf16.mxu0 0
  %2123 = vmatpush1.bf16.msra.mxu0 %v1887
  %2124 = vmatprep.subr.bf16.mxu0 0
  %2125 = vmatpush1.bf16.msra.mxu0 %v1890
  %2126 = vmatprep.subr.bf16.mxu0 0
  %2127 = vmatpush1.bf16.msra.mxu0 %v1893
  %2128 = vmatprep.mubr.bf16.mxu0 %v1596
  %2129 = vmatmul.mubr.bf16.gmra.mrb[0].mxu0 %v1593
  %v2130 = vpop.f32.mrb[0].mxu0
  %v2131 = vadd.f32 0.0, %v2130
  %v2132 = vpop.f32.mrb[0].mxu0
  %v2133 = vpop.f32.mrb[0].mxu0
  %v2134 = vadd.f32 0.0, %v2133
  %v2135 = vpop.f32.mrb[0].mxu0
  %2136 = vmatprep.mubr.bf16.mxu0 %v1595
  %2137 = vmatmul.mubr.bf16.gmra.mrb[0].mxu0 %v1592
  %v2138 = vpop.f32.mrb[0].mxu0
  %v2139 = vadd.f32 0.0, %v2138
  %v2140 = vpop.f32.mrb[0].mxu0
  %v2141 = vpop.f32.mrb[0].mxu0
  %v2142 = vadd.f32 0.0, %v2141
  %v2143 = vpop.f32.mrb[0].mxu0
  %2144 = vdwg.mxu0
  %2145 = vmatprep.subr.bf16.mxu0 0
  %2146 = vmatpush1.bf16.msra.mxu0 %v1896
  %2147 = vmatprep.subr.bf16.mxu0 0
  %2148 = vmatpush1.bf16.msra.mxu0 %v1899
  %2149 = vmatprep.subr.bf16.mxu0 0
  %2150 = vmatpush1.bf16.msra.mxu0 %v1902
  %2151 = vmatprep.subr.bf16.mxu0 0
  %2152 = vmatpush1.bf16.msra.mxu0 %v1905
  %2153 = vmatprep.subr.bf16.mxu0 0
  %2154 = vmatpush1.bf16.msra.mxu0 %v1908
  %2155 = vmatprep.subr.bf16.mxu0 0
  %2156 = vmatpush1.bf16.msra.mxu0 %v1911
  %2157 = vmatprep.subr.bf16.mxu0 0
  %2158 = vmatpush1.bf16.msra.mxu0 %v1914
  %2159 = vmatprep.subr.bf16.mxu0 0
  %2160 = vmatpush1.bf16.msra.mxu0 %v1917
  %2161 = vmatprep.subr.bf16.mxu0 0
  %2162 = vmatpush1.bf16.msra.mxu0 0
  %2163 = vmatprep.subr.bf16.mxu0 0
  %2164 = vmatpush1.bf16.msra.mxu0 0
  %2165 = vmatprep.subr.bf16.mxu0 0
  %2166 = vmatpush1.bf16.msra.mxu0 0
  %2167 = vmatprep.subr.bf16.mxu0 0
  %2168 = vmatpush1.bf16.msra.mxu0 0
  %2169 = vmatprep.subr.bf16.mxu0 0
  %2170 = vmatpush1.bf16.msra.mxu0 0
  %2171 = vmatprep.subr.bf16.mxu0 0
  %2172 = vmatpush1.bf16.msra.mxu0 0
  %2173 = vmatprep.subr.bf16.mxu0 0
  %2174 = vmatpush1.bf16.msra.mxu0 0
  %2175 = vmatprep.subr.bf16.mxu0 0
  %2176 = vmatpush1.bf16.msra.mxu0 0
  %2177 = vmatprep.mubr.bf16.mxu0 0
  %2178 = vmatmul.mubr.bf16.gmra.mrb[0].mxu0 %v1599
  %v2179 = vpop.f32.mrb[0].mxu0
  %v2180 = vadd.f32 %v2131, %v2179
  %v2181 = vpop.f32.mrb[0].mxu0
  %v2182 = vpop.f32.mrb[0].mxu0
  %v2183 = vadd.f32 %v2134, %v2182
  %v2184 = vpop.f32.mrb[0].mxu0
  %2185 = vmatprep.mubr.bf16.mxu0 0
  %2186 = vmatmul.mubr.bf16.gmra.mrb[0].mxu0 %v1598
  %v2187 = vpop.f32.mrb[0].mxu0
  %v2188 = vadd.f32 %v2139, %v2187
  %v2189 = vpop.f32.mrb[0].mxu0
  %v2190 = vpop.f32.mrb[0].mxu0
  %v2191 = vadd.f32 %v2142, %v2190
  %v2192 = vpop.f32.mrb[0].mxu0
  %2193 = vdwg.mxu0
  %v2194 = vadd.f32 %v1371, %v2078
  %v2195 = vadd.f32 %v1373, %v2080
  %v2196 = vadd.f32 %v1473, %v2180
  %v2197 = vadd.f32 %v1375, %v2082
  %v2198 = vadd.f32 %v1377, %v2084
  %v2199 = vadd.f32 %v1476, %v2183
  %v2200 = vadd.f32 %v1381, %v2088
  %v2201 = vadd.f32 %v1383, %v2090
  %v2202 = vadd.f32 %v1481, %v2188
  %v2203 = vadd.f32 %v1385, %v2092
  %v2204 = vadd.f32 %v1387, %v2094
  %v2205 = vadd.f32 %v1484, %v2191
  %2206 = vst [vmem:[%s2] sm:$0xff] %v2194
  %2207 = vst [vmem:[%s2 + $0x8] sm:$0xff] %v2195
  %2208 = vst [vmem:[%s2 + $0x10] sm:$0xff] %v2196
  %2209 = vst [vmem:[%s2 + $0x18] sm:$0xff] %v2197
  %2210 = vst [vmem:[%s2 + $0x20] sm:$0xff] %v2198
  %2211 = vst [vmem:[%s2 + $0x28] sm:$0xff] %v2199
  %2212 = vst [vmem:[%s2 + $0x30] sm:$0xff] %v2200
  %2213 = vst [vmem:[%s2 + $0x38] sm:$0xff] %v2201
  %2214 = vst [vmem:[%s2 + $0x40] sm:$0xff] %v2202
  %2215 = vst [vmem:[%s2 + $0x48] sm:$0x1] %v2203
  %2216 = vst [vmem:[%s2 + $0x50] sm:$0x1] %v2204
  %2217 = vst [vmem:[%s2 + $0x58] sm:$0x1] %v2205
  %p2218 = scmp.eq.s32.totalorder 0, 0
  // Predicated region
  $region10: #{conv_bn_relu.2} parent=0 // pred_check
    %p2219 = pneg %p2218
  $region11: #{conv_bn_relu.2} parent=0 // pred_check_branch
    %2221 = sbr.rel (%p2219) target = $region13
  $region12: #{conv_bn_relu.2} parent=0 // pred_region
    %v2222 = vlaneseq
    %vm2223 = vcmp.ge.s32.totalorder %v2222, 0
    %vm2224 = vcmp.lt.s32.totalorder %v2222, 384
    %vm2225 = vmand %vm2223, %vm2224
    %2226 = vst.msk [vmem:[%s3] sm:$0x7] %vm2225, 0.0
    %2227 = vst.msk [vmem:[%s4] sm:$0x7] %vm2225, 0.0
  $region13: #{conv_bn_relu.2} parent=0 // pred_fallthru
    _
  %v2228 = vld [vmem:[%s3] sm:$0x7]
  %v2229 = vadd.f32 %v2194, %v2197
  %v2230 = vadd.f32 %v2229, %v2200
  %vm2231 = vcmask 1040384
  %v2232 = vsel %vm2231, %v2203, 0.0
  %v2233 = vadd.f32 %v2230, %v2232
  %v2234 = vrot.slane %v2233, 4
  %v2235 = vadd.f32 %v2233, %v2234
  %v2236 = vrot.slane %v2235, 2
  %v2237 = vadd.f32 %v2235, %v2236
  %v2238 = vrot.slane %v2237, 1
  %v2239 = vadd.f32 %v2237, %v2238
  %v2240 = vadd.f32 %v2195, %v2198
  %v2241 = vadd.f32 %v2240, %v2201
  %v2242 = vsel %vm2231, %v2204, 0.0
  %v2243 = vadd.f32 %v2241, %v2242
  %v2244 = vrot.slane %v2243, 4
  %v2245 = vadd.f32 %v2243, %v2244
  %v2246 = vrot.slane %v2245, 2
  %v2247 = vadd.f32 %v2245, %v2246
  %v2248 = vrot.slane %v2247, 1
  %v2249 = vadd.f32 %v2247, %v2248
  %v2250 = vadd.f32 %v2196, %v2199
  %v2251 = vadd.f32 %v2250, %v2202
  %v2252 = vsel %vm2231, %v2205, 0.0
  %v2253 = vadd.f32 %v2251, %v2252
  %v2254 = vrot.slane %v2253, 4
  %v2255 = vadd.f32 %v2253, %v2254
  %v2256 = vrot.slane %v2255, 2
  %v2257 = vadd.f32 %v2255, %v2256
  %v2258 = vrot.slane %v2257, 1
  %v2259 = vadd.f32 %v2257, %v2258
  %v2263 = vcombine.low %v2239, %v2249
  %v2265 = vunpack.c.l.s4 1966171168
  %v2266 = vunpack.c.0.s8 %v2265
  %v2267 = vlaneseq
  %v2268 = vshrl.u32 %v2267, 7
  %v2269 = vsub.s32 %v2266, %v2268
  %v2270 = vrot.slane %v2263, %v2269
  %v2272 = vunpack.c.l.s4 1966171168
  %v2273 = vunpack.c.0.s8 %v2272
  %v2274 = vlaneseq
  %v2275 = vshrl.u32 %v2274, 7
  %v2276 = vsub.s32 %v2273, %v2275
  %v2277 = vrot.slane %v2259, %v2276
  %v2278 = vcombine.low %v2270, %v2277
  %v2280 = vunpack.c.l.s4 1966171168
  %v2281 = vunpack.c.0.s8 %v2280
  %v2282 = vlaneseq
  %v2283 = vshrl.u32 %v2282, 7
  %v2284 = vsub.s32 %v2281, %v2283
  %v2285 = vrot.slane %v2278, %v2284
  %v2287 = vadd.f32 %v2228, %v2285
  %v2288 = vlaneseq
  %vm2289 = vcmp.ge.s32.totalorder %v2288, 0
  %vm2290 = vcmp.lt.s32.totalorder %v2288, 384
  %vm2291 = vmand %vm2289, %vm2290
  %2292 = vst.msk [vmem:[%s3] sm:$0x7] %vm2291, %v2287
  %v2293 = vld [vmem:[%s4] sm:$0x7]
  %v2294 = vmul.f32 %v2194, %v2194
  %v2295 = vmul.f32 %v2195, %v2195
  %v2296 = vmul.f32 %v2196, %v2196
  %v2297 = vmul.f32 %v2197, %v2197
  %v2298 = vmul.f32 %v2198, %v2198
  %v2299 = vmul.f32 %v2199, %v2199
  %v2300 = vmul.f32 %v2200, %v2200
  %v2301 = vmul.f32 %v2201, %v2201
  %v2302 = vmul.f32 %v2202, %v2202
  %v2303 = vmul.f32 %v2203, %v2203
  %v2304 = vmul.f32 %v2204, %v2204
  %v2305 = vmul.f32 %v2205, %v2205
  %v2306 = vadd.f32 %v2294, %v2297
  %v2307 = vadd.f32 %v2306, %v2300
  %v2308 = vsel %vm2231, %v2303, 0.0
  %v2309 = vadd.f32 %v2307, %v2308
  %v2310 = vrot.slane %v2309, 4
  %v2311 = vadd.f32 %v2309, %v2310
  %v2312 = vrot.slane %v2311, 2
  %v2313 = vadd.f32 %v2311, %v2312
  %v2314 = vrot.slane %v2313, 1
  %v2315 = vadd.f32 %v2313, %v2314
  %v2316 = vadd.f32 %v2295, %v2298
  %v2317 = vadd.f32 %v2316, %v2301
  %v2318 = vsel %vm2231, %v2304, 0.0
  %v2319 = vadd.f32 %v2317, %v2318
  %v2320 = vrot.slane %v2319, 4
  %v2321 = vadd.f32 %v2319, %v2320
  %v2322 = vrot.slane %v2321, 2
  %v2323 = vadd.f32 %v2321, %v2322
  %v2324 = vrot.slane %v2323, 1
  %v2325 = vadd.f32 %v2323, %v2324
  %v2326 = vadd.f32 %v2296, %v2299
  %v2327 = vadd.f32 %v2326, %v2302
  %v2328 = vsel %vm2231, %v2305, 0.0
  %v2329 = vadd.f32 %v2327, %v2328
  %v2330 = vrot.slane %v2329, 4
  %v2331 = vadd.f32 %v2329, %v2330
  %v2332 = vrot.slane %v2331, 2
  %v2333 = vadd.f32 %v2331, %v2332
  %v2334 = vrot.slane %v2333, 1
  %v2335 = vadd.f32 %v2333, %v2334
  %v2339 = vcombine.low %v2315, %v2325
  %v2341 = vunpack.c.l.s4 1966171168
  %v2342 = vunpack.c.0.s8 %v2341
  %v2343 = vlaneseq
  %v2344 = vshrl.u32 %v2343, 7
  %v2345 = vsub.s32 %v2342, %v2344
  %v2346 = vrot.slane %v2339, %v2345
  %v2348 = vunpack.c.l.s4 1966171168
  %v2349 = vunpack.c.0.s8 %v2348
  %v2350 = vlaneseq
  %v2351 = vshrl.u32 %v2350, 7
  %v2352 = vsub.s32 %v2349, %v2351
  %v2353 = vrot.slane %v2335, %v2352
  %v2354 = vcombine.low %v2346, %v2353
  %v2356 = vunpack.c.l.s4 1966171168
  %v2357 = vunpack.c.0.s8 %v2356
  %v2358 = vlaneseq
  %v2359 = vshrl.u32 %v2358, 7
  %v2360 = vsub.s32 %v2357, %v2359
  %v2361 = vrot.slane %v2354, %v2360
  %v2363 = vadd.f32 %v2293, %v2361
  %2364 = vst.msk [vmem:[%s4] sm:$0x7] %vm2291, %v2363
  // Predicated region
  $region14: #{conv_bn_relu.2} parent=0 // pred_check
    _
  $region15: #{conv_bn_relu.2} parent=0 // pred_check_branch
    %2366 = sbr.rel (0) target = $region17
  $region16: #{conv_bn_relu.2} parent=0 // pred_region
    _
  $region17: #{conv_bn_relu.2} parent=0 // pred_fallthru
    _
  // Predicated region
  $region18: #{conv_bn_relu.2} parent=0 // pred_check
    _
  $region19: #{conv_bn_relu.2} parent=0 // pred_check_branch
    %2368 = sbr.rel (0) target = $region21
  $region20: #{conv_bn_relu.2} parent=0 // pred_region
    _
  $region21: #{conv_bn_relu.2} parent=0 // pred_fallthru
    _
  // Predicated region
  $region22: #{conv_bn_relu.2} parent=0 // pred_check
    _
  $region23: #{conv_bn_relu.2} parent=0 // pred_check_branch
    %2370 = sbr.rel (0) target = $region25
  $region24: #{conv_bn_relu.2} parent=0 // pred_region
    _
  $region25: #{conv_bn_relu.2} parent=0 // pred_fallthru
    _
  // Predicated region
  $region26: #{conv_bn_relu.2} parent=0 // pred_check
    _
  $region27: #{conv_bn_relu.2} parent=0 // pred_check_branch
    %2372 = sbr.rel (0) target = $region29
  $region28: #{conv_bn_relu.2} parent=0 // pred_region
    _
  $region29: #{conv_bn_relu.2} parent=0 // pred_fallthru
    _
  // Predicated region
  $region30: #{conv_bn_relu.2} parent=0 // pred_check
    _
  $region31: #{conv_bn_relu.2} parent=0 // pred_check_branch
    %2374 = sbr.rel (0) target = $region33
  $region32: #{conv_bn_relu.2} parent=0 // pred_region
    _
  $region33: #{conv_bn_relu.2} parent=0 // pred_fallthru
    _
  // Predicated region
  $region34: #{conv_bn_relu.2} parent=0 // pred_check
    _
  $region35: #{conv_bn_relu.2} parent=0 // pred_check_branch
    %2376 = sbr.rel (0) target = $region37
  $region36: #{conv_bn_relu.2} parent=0 // pred_region
    _
  $region37: #{conv_bn_relu.2} parent=0 // pred_fallthru
    _

</llo_original>
